<compile_context>
chip_gen: v7x
topology: tpu7x:2x2x1
jax: 0.10.0
libtpu: 0.0.40
codegen_flags: <defaults>
</compile_context>

<pallas_src>
import functools
import math

import jax
import jax.numpy as jnp
from jax import lax
from jax.experimental import pallas as pl
from jax.experimental.pallas import tpu as pltpu


# ----------------------------- Fused MHA kernel ------------------------------
def _mha_fused_kernel(q_ref, k_ref, v_ref,
                      wq_ref, wk_ref, wv_ref,
                      bq_ref, bk_ref, bv_ref,
                      ctx_ref, attn_ref,
                      *, num_heads, d_head, compute_dtype):
    # One grid step == one batch block (Bt batch elements); all heads together.
    Bt, Lq, D = q_ref.shape
    Lk = k_ref.shape[1]
    H, dh = num_heads, d_head

    # Collapse the batch block into rows for the projections.  The minor (lane)
    # dim D is unchanged and Lq/Lk are multiples of 8, so this is a trivial
    # sublane-grid reinterpretation, not a relayout.
    xq = q_ref[...].reshape(Bt * Lq, D).astype(compute_dtype)
    xk = k_ref[...].reshape(Bt * Lk, D).astype(compute_dtype)
    xv = v_ref[...].reshape(Bt * Lk, D).astype(compute_dtype)

    wq = wq_ref[...].astype(compute_dtype)
    wk = wk_ref[...].astype(compute_dtype)
    wv = wv_ref[...].astype(compute_dtype)

    # Q/K/V projections with f32 MXU accumulation.  The 1/sqrt(d_head) scale
    # is already folded into wq/bq at init time (no per-step multiply here).
    # NOTE: query/key/value are distinct inputs (general cross-attention), so a
    # single concatenated (D, 3D) matmul is not applicable.
    q = jnp.dot(xq, wq, preferred_element_type=jnp.float32) + bq_ref[...]
    k = jnp.dot(xk, wk, preferred_element_type=jnp.float32) + bk_ref[...]
    v = jnp.dot(xv, wv, preferred_element_type=jnp.float32) + bv_ref[...]

    qc = q.astype(compute_dtype)
    kc = k.astype(compute_dtype)
    vc = v.astype(compute_dtype)

    # Contract the shared minor dh axis of Q and K directly -> no explicit K^T
    # and no lane-splitting reshape/transpose head split.
    ctr = (((1,), (1,)), ((), ()))  # contract last dim of both operands

    for b in range(Bt):                       # static, unrolled at trace time
        r0 = b * Lq
        s0 = b * Lk
        head_ctx = []
        for h in range(H):                    # static, unrolled at trace time
            lo = h * dh
            qh = qc[r0:r0 + Lq, lo:lo + dh]   # (Lq, dh) static row/lane slice
            kh = kc[s0:s0 + Lk, lo:lo + dh]   # (Lk, dh)
            vh = vc[s0:s0 + Lk, lo:lo + dh]   # (Lk, dh)

            score = lax.dot_general(qh, kh, ctr,
                                    preferred_element_type=jnp.float32)  # (Lq, Lk)

            # Numerically-stable softmax, exact normalization (rows sum to 1).
            m = jnp.max(score, axis=-1, keepdims=True)
            e = jnp.exp(score - m)
            p = e / jnp.sum(e, axis=-1, keepdims=True)                    # f32

            # Attention weights stored directly in head-major (H, B, Lq, Lk)
            # order -> only a free contiguous reshape outside the kernel.
            attn_ref[h, b] = p.astype(attn_ref.dtype)

            head_ctx.append(jnp.dot(p.astype(compute_dtype), vh,
                                    preferred_element_type=jnp.float32))  # (Lq, dh)

        # Head merge: lane-axis concatenate straight into the final
        # (Lq, H*dh) layout -- no transpose.
        ctx_ref[b] = jnp.concatenate(head_ctx, axis=-1).astype(ctx_ref.dtype)


def mha_pallas_forward(query, key, value, wq_t, wk_t, wv_t, bq, bk, bv,
                       num_heads, *, num_batch_blocks=1,
                       compute_dtype=jnp.float32):
    """Fused multi-head attention forward.

    Returns (context (B, Lq, D), attn head-major (H, B, Lq, Lk)).
    `num_batch_blocks` > 1 keeps >=2 parallel grid steps (v7x 2-TC sharding)
    once B is large enough; the default 1 maximizes rows per MXU matmul and
    minimizes grid-step overhead at small B.
    """
    B, Lq, D = query.shape
    Lk = key.shape[1]
    H = num_heads
    dh = D // H
    assert B % num_batch_blocks == 0, "B must be divisible by num_batch_blocks"
    Bt = B // num_batch_blocks

    kern = functools.partial(_mha_fused_kernel, num_heads=H, d_head=dh,
                             compute_dtype=compute_dtype)

    ctx, attn = pl.pallas_call(
        kern,
        out_shape=(
            jax.ShapeDtypeStruct((B, Lq, D), query.dtype),      # context
            jax.ShapeDtypeStruct((H, B, Lq, Lk), jnp.float32),  # attn, head-major
        ),
        grid_spec=pltpu.PrefetchScalarGridSpec(
            num_scalar_prefetch=0,
            grid=(num_batch_blocks,),
            in_specs=[
                pl.BlockSpec((Bt, Lq, D), lambda b: (b, 0, 0)),   # query
                pl.BlockSpec((Bt, Lk, D), lambda b: (b, 0, 0)),   # key
                pl.BlockSpec((Bt, Lk, D), lambda b: (b, 0, 0)),   # value
                # Constant-index weight/bias blocks (fetched once; see review
                # note about pl.Buffered(1) for VMEM-tight v7x at large D).
                pl.BlockSpec((D, D), lambda b: (0, 0)),           # Wq (in, out)
                pl.BlockSpec((D, D), lambda b: (0, 0)),           # Wk
                pl.BlockSpec((D, D), lambda b: (0, 0)),           # Wv
                pl.BlockSpec((1, D), lambda b: (0, 0)),           # bq
                pl.BlockSpec((1, D), lambda b: (0, 0)),           # bk
                pl.BlockSpec((1, D), lambda b: (0, 0)),           # bv
            ],
            out_specs=(
                pl.BlockSpec((Bt, Lq, D), lambda b: (b, 0, 0)),
                pl.BlockSpec((H, Bt, Lq, Lk), lambda b: (0, b, 0, 0)),
            ),
        ),
        # "parallel" batch-block axis -> shards across the 2 TensorCores on
        # v7x when num_batch_blocks >= 2; no-op on v5e / v6e.
        compiler_params=pltpu.CompilerParams(
            dimension_semantics=("parallel",)),
    )(query, key, value, wq_t, wk_t, wv_t, bq, bk, bv)
    return ctx, attn


# ----------------------------- Module wrapper --------------------------------
class MultiHeadAttentionPallas:
    """Mirrors torch MultiHeadAttention(d_model, num_heads) forward, mask=None."""

    def __init__(self, d_model=32, num_heads=4, key=None,
                 num_batch_blocks=1, compute_dtype=jnp.float32):
        assert d_model % num_heads == 0
        self.d_model = d_model
        self.num_heads = num_heads
        self.d_head = d_model // num_heads
        self.num_batch_blocks = num_batch_blocks
        # Set compute_dtype=jnp.bfloat16 on v6e/v7x for MXU peak once shapes
        # grow; f32 default keeps exact parity with the f32 reference here.
        self.compute_dtype = compute_dtype

        if key is None:
            key = jax.random.PRNGKey(42)
        ks = jax.random.split(key, 6)
        bound = 1.0 / math.sqrt(d_model)  # PyTorch nn.Linear default init range

        def init(k, shape):
            return jax.random.uniform(k, shape, jnp.float32, -bound, bound)

        # nn.Linear stores weight (out, in); we store the transpose (in, out).
        self.wq_t = init(ks[0], (d_model, d_model))
        self.bq = init(ks[1], (1, d_model))
        self.wk_t = init(ks[2], (d_model, d_model))
        self.bk = init(ks[3], (1, d_model))
        self.wv_t = init(ks[4], (d_model, d_model))
        self.bv = init(ks[5], (1, d_model))

        # Fold the 1/sqrt(d_head) attention scale into Wq/bq ONCE at init
        # (mathematically identical; removes the per-step in-kernel multiply).
        scale = 1.0 / math.sqrt(self.d_head)
        self.wq_t_scaled = self.wq_t * scale
        self.bq_scaled = self.bq * scale

    def __call__(self, query, key, value, mask=None):
        # TODO(synk): mask (masked_fill) path not implemented.
        assert mask is None, "mask path not implemented in the Pallas kernel"
        B, Lq, _ = query.shape
        Lk = key.shape[1]
        ctx, attn = mha_pallas_forward(
            query, key, value,
            self.wq_t_scaled, self.wk_t, self.wv_t,
            self.bq_scaled, self.bk, self.bv,
            self.num_heads,
            num_batch_blocks=self.num_batch_blocks,
            compute_dtype=self.compute_dtype)
        # attn is already head-major (H, B, Lq, Lk) -> (H*B, Lq, Lk) is a free
        # contiguous reshape (matches torch's permute(2,0,1,3).view(...)).
        attn = attn.reshape(self.num_heads * B, Lq, Lk)
        return ctx, attn


# ----------------------------- Pure-JAX reference ----------------------------
def reference_forward(mha, query, key, value):
    B, Lq, D = query.shape
    Lk = key.shape[1]
    H, dh = mha.num_heads, mha.d_head
    q = query @ mha.wq_t + mha.bq
    k = key @ mha.wk_t + mha.bk
    v = value @ mha.wv_t + mha.bv
    qh = q.reshape(B, Lq, H, dh).transpose(2, 0, 1, 3).reshape(H * B, Lq, dh)
    kh = k.reshape(B, Lk, H, dh).transpose(2, 0, 1, 3).reshape(H * B, Lk, dh)
    vh = v.reshape(B, Lk, H, dh).transpose(2, 0, 1, 3).reshape(H * B, Lk, dh)
    score = jnp.einsum("bqd,bkd->bqk", qh, kh) / math.sqrt(dh)
    attn = jax.nn.softmax(score, axis=-1)
    ctx = jnp.einsum("bqk,bkd->bqd", attn, vh)
    ctx = ctx.reshape(H, B, Lq, dh).transpose(1, 2, 0, 3).reshape(B, Lq, H * dh)
    return ctx, attn


# ----------------------------- Main ------------------------------------------
if __name__ == "__main__":
    B, L, D, H = 2, 8, 32, 4

    root = jax.random.PRNGKey(0)
    kq, kk, kv, kparam = jax.random.split(root, 4)
    query = jax.random.normal(kq, (B, L, D), jnp.float32)
    key = jax.random.normal(kk, (B, L, D), jnp.float32)
    value = jax.random.normal(kv, (B, L, D), jnp.float32)

    mha = MultiHeadAttentionPallas(d_model=D, num_heads=H, key=kparam)

    context, attn = mha(query, key, value)
    jax.block_until_ready(context)
    jax.block_until_ready(attn)

    ctx_ref, attn_ref = reference_forward(mha, query, key, value)
    assert context.shape == (B, L, D)
    assert attn.shape == (B * H, L, L)
    # Exact softmax normalization is used in-kernel; remaining tolerance only
    # covers MXU vs XLA f32-matmul rounding differences.
    assert jnp.allclose(context, ctx_ref, atol=2e-3, rtol=2e-3), \
        float(jnp.max(jnp.abs(context - ctx_ref)))
    assert jnp.allclose(attn, attn_ref, atol=2e-3, rtol=2e-3), \
        float(jnp.max(jnp.abs(attn - attn_ref)))

    print("KERNEL_OK")
</pallas_src>

<mosaic_0001>
module attributes {stable_mosaic.version = 11 : i64} {
  func.func @_mha_fused_kernel(%arg0: i32, %arg1: memref<2x8x32xf32, #tpu.memory_space<vmem>>, %arg2: memref<2x8x32xf32, #tpu.memory_space<vmem>>, %arg3: memref<2x8x32xf32, #tpu.memory_space<vmem>>, %arg4: memref<32x32xf32, #tpu.memory_space<vmem>>, %arg5: memref<32x32xf32, #tpu.memory_space<vmem>>, %arg6: memref<32x32xf32, #tpu.memory_space<vmem>>, %arg7: memref<1x32xf32, #tpu.memory_space<vmem>>, %arg8: memref<1x32xf32, #tpu.memory_space<vmem>>, %arg9: memref<1x32xf32, #tpu.memory_space<vmem>>, %arg10: memref<2x8x32xf32, #tpu.memory_space<vmem>>, %arg11: memref<4x2x8x8xf32, #tpu.memory_space<vmem>>) attributes {dimension_semantics = [#tpu.dimension_semantics<parallel>], iteration_bounds = array<i64: 1>, scalar_prefetch = 0 : i64, scratch_operands = 0 : i64, tpu.core_type = #tpu.core_type<tc>, window_params = [{transform_indices = @transform_0, window_bounds = array<i64: 2, 8, 32>}, {transform_indices = @transform_1, window_bounds = array<i64: 2, 8, 32>}, {transform_indices = @transform_2, window_bounds = array<i64: 2, 8, 32>}, {pipeline_mode = #tpu.pipeline_mode<synchronous>, transform_indices = @transform_3, window_bounds = array<i64: 32, 32>}, {pipeline_mode = #tpu.pipeline_mode<synchronous>, transform_indices = @transform_4, window_bounds = array<i64: 32, 32>}, {pipeline_mode = #tpu.pipeline_mode<synchronous>, transform_indices = @transform_5, window_bounds = array<i64: 32, 32>}, {pipeline_mode = #tpu.pipeline_mode<synchronous>, transform_indices = @transform_6, window_bounds = array<i64: 1, 32>}, {pipeline_mode = #tpu.pipeline_mode<synchronous>, transform_indices = @transform_7, window_bounds = array<i64: 1, 32>}, {pipeline_mode = #tpu.pipeline_mode<synchronous>, transform_indices = @transform_8, window_bounds = array<i64: 1, 32>}, {transform_indices = @transform_9, window_bounds = array<i64: 2, 8, 32>}, {transform_indices = @transform_10, window_bounds = array<i64: 4, 2, 8, 8>}]} {
    %c0 = arith.constant 0 : index
    %c0_0 = arith.constant 0 : index
    %c0_1 = arith.constant 0 : index
    %0 = vector.load %arg1[%c0, %c0_0, %c0_1] : memref<2x8x32xf32, #tpu.memory_space<vmem>>, vector<2x8x32xf32>
    %1 = vector.shape_cast %0 : vector<2x8x32xf32> to vector<16x32xf32>
    %c0_2 = arith.constant 0 : index
    %c0_3 = arith.constant 0 : index
    %c0_4 = arith.constant 0 : index
    %2 = vector.load %arg2[%c0_2, %c0_3, %c0_4] : memref<2x8x32xf32, #tpu.memory_space<vmem>>, vector<2x8x32xf32>
    %3 = vector.shape_cast %2 : vector<2x8x32xf32> to vector<16x32xf32>
    %c0_5 = arith.constant 0 : index
    %c0_6 = arith.constant 0 : index
    %c0_7 = arith.constant 0 : index
    %4 = vector.load %arg3[%c0_5, %c0_6, %c0_7] : memref<2x8x32xf32, #tpu.memory_space<vmem>>, vector<2x8x32xf32>
    %5 = vector.shape_cast %4 : vector<2x8x32xf32> to vector<16x32xf32>
    %c0_8 = arith.constant 0 : index
    %c0_9 = arith.constant 0 : index
    %6 = vector.load %arg4[%c0_8, %c0_9] : memref<32x32xf32, #tpu.memory_space<vmem>>, vector<32x32xf32>
    %c0_10 = arith.constant 0 : index
    %c0_11 = arith.constant 0 : index
    %7 = vector.load %arg5[%c0_10, %c0_11] : memref<32x32xf32, #tpu.memory_space<vmem>>, vector<32x32xf32>
    %c0_12 = arith.constant 0 : index
    %c0_13 = arith.constant 0 : index
    %8 = vector.load %arg6[%c0_12, %c0_13] : memref<32x32xf32, #tpu.memory_space<vmem>>, vector<32x32xf32>
    %cst = arith.constant dense<0.000000e+00> : vector<16x32xf32>
    %9 = tpu.matmul %1, %6, %cst {dimension_numbers = #tpu.dot_dimension_numbers<[1], [0], [0], [1], [0, 0, 1, 1], [], []>} : vector<16x32xf32>, vector<32x32xf32>, vector<16x32xf32> -> vector<16x32xf32>
    %c0_14 = arith.constant 0 : index
    %c0_15 = arith.constant 0 : index
    %10 = vector.load %arg7[%c0_14, %c0_15] : memref<1x32xf32, #tpu.memory_space<vmem>>, vector<1x32xf32>
    %11 = vector.broadcast %10 : vector<1x32xf32> to vector<16x32xf32>
    %12 = arith.addf %9, %11 : vector<16x32xf32>
    %cst_16 = arith.constant dense<0.000000e+00> : vector<16x32xf32>
    %13 = tpu.matmul %3, %7, %cst_16 {dimension_numbers = #tpu.dot_dimension_numbers<[1], [0], [0], [1], [0, 0, 1, 1], [], []>} : vector<16x32xf32>, vector<32x32xf32>, vector<16x32xf32> -> vector<16x32xf32>
    %c0_17 = arith.constant 0 : index
    %c0_18 = arith.constant 0 : index
    %14 = vector.load %arg8[%c0_17, %c0_18] : memref<1x32xf32, #tpu.memory_space<vmem>>, vector<1x32xf32>
    %15 = vector.broadcast %14 : vector<1x32xf32> to vector<16x32xf32>
    %16 = arith.addf %13, %15 : vector<16x32xf32>
    %cst_19 = arith.constant dense<0.000000e+00> : vector<16x32xf32>
    %17 = tpu.matmul %5, %8, %cst_19 {dimension_numbers = #tpu.dot_dimension_numbers<[1], [0], [0], [1], [0, 0, 1, 1], [], []>} : vector<16x32xf32>, vector<32x32xf32>, vector<16x32xf32> -> vector<16x32xf32>
    %c0_20 = arith.constant 0 : index
    %c0_21 = arith.constant 0 : index
    %18 = vector.load %arg9[%c0_20, %c0_21] : memref<1x32xf32, #tpu.memory_space<vmem>>, vector<1x32xf32>
    %19 = vector.broadcast %18 : vector<1x32xf32> to vector<16x32xf32>
    %20 = arith.addf %17, %19 : vector<16x32xf32>
    %21 = vector.extract_strided_slice %12 {offsets = [0, 0], sizes = [8, 8], strides = [1, 1]} : vector<16x32xf32> to vector<8x8xf32>
    %22 = vector.extract_strided_slice %16 {offsets = [0, 0], sizes = [8, 8], strides = [1, 1]} : vector<16x32xf32> to vector<8x8xf32>
    %23 = vector.extract_strided_slice %20 {offsets = [0, 0], sizes = [8, 8], strides = [1, 1]} : vector<16x32xf32> to vector<8x8xf32>
    %cst_22 = arith.constant dense<0.000000e+00> : vector<8x8xf32>
    %24 = tpu.matmul %21, %22, %cst_22 {dimension_numbers = #tpu.dot_dimension_numbers<[1], [1], [0], [0], [0, 0, 1, 0], [], []>} : vector<8x8xf32>, vector<8x8xf32>, vector<8x8xf32> -> vector<8x8xf32>
    %cst_23 = arith.constant dense<0xFF800000> : vector<8xf32>
    %25 = vector.multi_reduction <maximumf>, %24, %cst_23 [1] : vector<8x8xf32> to vector<8xf32>
    %26 = vector.shape_cast %25 : vector<8xf32> to vector<8x1xf32>
    %27 = vector.broadcast %26 : vector<8x1xf32> to vector<8x8xf32>
    %28 = arith.subf %24, %27 : vector<8x8xf32>
    %29 = math.exp %28 : vector<8x8xf32>
    %cst_24 = arith.constant dense<0.000000e+00> : vector<8xf32>
    %30 = vector.multi_reduction <add>, %29, %cst_24 [1] : vector<8x8xf32> to vector<8xf32>
    %31 = vector.shape_cast %30 : vector<8xf32> to vector<8x1xf32>
    %32 = vector.broadcast %31 : vector<8x1xf32> to vector<8x8xf32>
    %33 = arith.divf %29, %32 : vector<8x8xf32>
    %c0_25 = arith.constant 0 : index
    %c0_26 = arith.constant 0 : index
    %c0_27 = arith.constant 0 : index
    %c0_28 = arith.constant 0 : index
    %34 = vector.load %arg11[%c0_25, %c0_26, %c0_27, %c0_28] : memref<4x2x8x8xf32, #tpu.memory_space<vmem>>, vector<1x1x8x8xf32>
    %35 = vector.shape_cast %34 : vector<1x1x8x8xf32> to vector<8x8xf32>
    %36 = vector.shape_cast %33 : vector<8x8xf32> to vector<1x1x8x8xf32>
    tpu.vector_store %arg11[%c0_25, %c0_26, %c0_27, %c0_28], %36 {strides = array<i32>} : memref<4x2x8x8xf32, #tpu.memory_space<vmem>>, vector<1x1x8x8xf32>,
    %cst_29 = arith.constant dense<0.000000e+00> : vector<8x8xf32>
    %37 = tpu.matmul %33, %23, %cst_29 {dimension_numbers = #tpu.dot_dimension_numbers<[1], [0], [0], [1], [0, 0, 1, 1], [], []>} : vector<8x8xf32>, vector<8x8xf32>, vector<8x8xf32> -> vector<8x8xf32>
    %38 = vector.extract_strided_slice %12 {offsets = [0, 8], sizes = [8, 8], strides = [1, 1]} : vector<16x32xf32> to vector<8x8xf32>
    %39 = vector.extract_strided_slice %16 {offsets = [0, 8], sizes = [8, 8], strides = [1, 1]} : vector<16x32xf32> to vector<8x8xf32>
    %40 = vector.extract_strided_slice %20 {offsets = [0, 8], sizes = [8, 8], strides = [1, 1]} : vector<16x32xf32> to vector<8x8xf32>
    %cst_30 = arith.constant dense<0.000000e+00> : vector<8x8xf32>
    %41 = tpu.matmul %38, %39, %cst_30 {dimension_numbers = #tpu.dot_dimension_numbers<[1], [1], [0], [0], [0, 0, 1, 0], [], []>} : vector<8x8xf32>, vector<8x8xf32>, vector<8x8xf32> -> vector<8x8xf32>
    %cst_31 = arith.constant dense<0xFF800000> : vector<8xf32>
    %42 = vector.multi_reduction <maximumf>, %41, %cst_31 [1] : vector<8x8xf32> to vector<8xf32>
    %43 = vector.shape_cast %42 : vector<8xf32> to vector<8x1xf32>
    %44 = vector.broadcast %43 : vector<8x1xf32> to vector<8x8xf32>
    %45 = arith.subf %41, %44 : vector<8x8xf32>
    %46 = math.exp %45 : vector<8x8xf32>
    %cst_32 = arith.constant dense<0.000000e+00> : vector<8xf32>
    %47 = vector.multi_reduction <add>, %46, %cst_32 [1] : vector<8x8xf32> to vector<8xf32>
    %48 = vector.shape_cast %47 : vector<8xf32> to vector<8x1xf32>
    %49 = vector.broadcast %48 : vector<8x1xf32> to vector<8x8xf32>
    %50 = arith.divf %46, %49 : vector<8x8xf32>
    %c1 = arith.constant 1 : index
    %c0_33 = arith.constant 0 : index
    %c0_34 = arith.constant 0 : index
    %c0_35 = arith.constant 0 : index
    %51 = vector.load %arg11[%c1, %c0_33, %c0_34, %c0_35] : memref<4x2x8x8xf32, #tpu.memory_space<vmem>>, vector<1x1x8x8xf32>
    %52 = vector.shape_cast %51 : vector<1x1x8x8xf32> to vector<8x8xf32>
    %53 = vector.shape_cast %50 : vector<8x8xf32> to vector<1x1x8x8xf32>
    tpu.vector_store %arg11[%c1, %c0_33, %c0_34, %c0_35], %53 {strides = array<i32>} : memref<4x2x8x8xf32, #tpu.memory_space<vmem>>, vector<1x1x8x8xf32>,
    %cst_36 = arith.constant dense<0.000000e+00> : vector<8x8xf32>
    %54 = tpu.matmul %50, %40, %cst_36 {dimension_numbers = #tpu.dot_dimension_numbers<[1], [0], [0], [1], [0, 0, 1, 1], [], []>} : vector<8x8xf32>, vector<8x8xf32>, vector<8x8xf32> -> vector<8x8xf32>
    %55 = vector.extract_strided_slice %12 {offsets = [0, 16], sizes = [8, 8], strides = [1, 1]} : vector<16x32xf32> to vector<8x8xf32>
    %56 = vector.extract_strided_slice %16 {offsets = [0, 16], sizes = [8, 8], strides = [1, 1]} : vector<16x32xf32> to vector<8x8xf32>
    %57 = vector.extract_strided_slice %20 {offsets = [0, 16], sizes = [8, 8], strides = [1, 1]} : vector<16x32xf32> to vector<8x8xf32>
    %cst_37 = arith.constant dense<0.000000e+00> : vector<8x8xf32>
    %58 = tpu.matmul %55, %56, %cst_37 {dimension_numbers = #tpu.dot_dimension_numbers<[1], [1], [0], [0], [0, 0, 1, 0], [], []>} : vector<8x8xf32>, vector<8x8xf32>, vector<8x8xf32> -> vector<8x8xf32>
    %cst_38 = arith.constant dense<0xFF800000> : vector<8xf32>
    %59 = vector.multi_reduction <maximumf>, %58, %cst_38 [1] : vector<8x8xf32> to vector<8xf32>
    %60 = vector.shape_cast %59 : vector<8xf32> to vector<8x1xf32>
    %61 = vector.broadcast %60 : vector<8x1xf32> to vector<8x8xf32>
    %62 = arith.subf %58, %61 : vector<8x8xf32>
    %63 = math.exp %62 : vector<8x8xf32>
    %cst_39 = arith.constant dense<0.000000e+00> : vector<8xf32>
    %64 = vector.multi_reduction <add>, %63, %cst_39 [1] : vector<8x8xf32> to vector<8xf32>
    %65 = vector.shape_cast %64 : vector<8xf32> to vector<8x1xf32>
    %66 = vector.broadcast %65 : vector<8x1xf32> to vector<8x8xf32>
    %67 = arith.divf %63, %66 : vector<8x8xf32>
    %c2 = arith.constant 2 : index
    %c0_40 = arith.constant 0 : index
    %c0_41 = arith.constant 0 : index
    %c0_42 = arith.constant 0 : index
    %68 = vector.load %arg11[%c2, %c0_40, %c0_41, %c0_42] : memref<4x2x8x8xf32, #tpu.memory_space<vmem>>, vector<1x1x8x8xf32>
    %69 = vector.shape_cast %68 : vector<1x1x8x8xf32> to vector<8x8xf32>
    %70 = vector.shape_cast %67 : vector<8x8xf32> to vector<1x1x8x8xf32>
    tpu.vector_store %arg11[%c2, %c0_40, %c0_41, %c0_42], %70 {strides = array<i32>} : memref<4x2x8x8xf32, #tpu.memory_space<vmem>>, vector<1x1x8x8xf32>,
    %cst_43 = arith.constant dense<0.000000e+00> : vector<8x8xf32>
    %71 = tpu.matmul %67, %57, %cst_43 {dimension_numbers = #tpu.dot_dimension_numbers<[1], [0], [0], [1], [0, 0, 1, 1], [], []>} : vector<8x8xf32>, vector<8x8xf32>, vector<8x8xf32> -> vector<8x8xf32>
    %72 = vector.extract_strided_slice %12 {offsets = [0, 24], sizes = [8, 8], strides = [1, 1]} : vector<16x32xf32> to vector<8x8xf32>
    %73 = vector.extract_strided_slice %16 {offsets = [0, 24], sizes = [8, 8], strides = [1, 1]} : vector<16x32xf32> to vector<8x8xf32>
    %74 = vector.extract_strided_slice %20 {offsets = [0, 24], sizes = [8, 8], strides = [1, 1]} : vector<16x32xf32> to vector<8x8xf32>
    %cst_44 = arith.constant dense<0.000000e+00> : vector<8x8xf32>
    %75 = tpu.matmul %72, %73, %cst_44 {dimension_numbers = #tpu.dot_dimension_numbers<[1], [1], [0], [0], [0, 0, 1, 0], [], []>} : vector<8x8xf32>, vector<8x8xf32>, vector<8x8xf32> -> vector<8x8xf32>
    %cst_45 = arith.constant dense<0xFF800000> : vector<8xf32>
    %76 = vector.multi_reduction <maximumf>, %75, %cst_45 [1] : vector<8x8xf32> to vector<8xf32>
    %77 = vector.shape_cast %76 : vector<8xf32> to vector<8x1xf32>
    %78 = vector.broadcast %77 : vector<8x1xf32> to vector<8x8xf32>
    %79 = arith.subf %75, %78 : vector<8x8xf32>
    %80 = math.exp %79 : vector<8x8xf32>
    %cst_46 = arith.constant dense<0.000000e+00> : vector<8xf32>
    %81 = vector.multi_reduction <add>, %80, %cst_46 [1] : vector<8x8xf32> to vector<8xf32>
    %82 = vector.shape_cast %81 : vector<8xf32> to vector<8x1xf32>
    %83 = vector.broadcast %82 : vector<8x1xf32> to vector<8x8xf32>
    %84 = arith.divf %80, %83 : vector<8x8xf32>
    %c3 = arith.constant 3 : index
    %c0_47 = arith.constant 0 : index
    %c0_48 = arith.constant 0 : index
    %c0_49 = arith.constant 0 : index
    %85 = vector.load %arg11[%c3, %c0_47, %c0_48, %c0_49] : memref<4x2x8x8xf32, #tpu.memory_space<vmem>>, vector<1x1x8x8xf32>
    %86 = vector.shape_cast %85 : vector<1x1x8x8xf32> to vector<8x8xf32>
    %87 = vector.shape_cast %84 : vector<8x8xf32> to vector<1x1x8x8xf32>
    tpu.vector_store %arg11[%c3, %c0_47, %c0_48, %c0_49], %87 {strides = array<i32>} : memref<4x2x8x8xf32, #tpu.memory_space<vmem>>, vector<1x1x8x8xf32>,
    %cst_50 = arith.constant dense<0.000000e+00> : vector<8x8xf32>
    %88 = tpu.matmul %84, %74, %cst_50 {dimension_numbers = #tpu.dot_dimension_numbers<[1], [0], [0], [1], [0, 0, 1, 1], [], []>} : vector<8x8xf32>, vector<8x8xf32>, vector<8x8xf32> -> vector<8x8xf32>
    %89 = tpu.concatenate %37, %54, %71, %88 in 1 : vector<8x8xf32>, vector<8x8xf32>, vector<8x8xf32>, vector<8x8xf32> -> vector<8x32xf32>
    %c0_51 = arith.constant 0 : index
    %c0_52 = arith.constant 0 : index
    %c0_53 = arith.constant 0 : index
    %90 = vector.load %arg10[%c0_51, %c0_52, %c0_53] : memref<2x8x32xf32, #tpu.memory_space<vmem>>, vector<1x8x32xf32>
    %91 = vector.shape_cast %90 : vector<1x8x32xf32> to vector<8x32xf32>
    %92 = vector.shape_cast %89 : vector<8x32xf32> to vector<1x8x32xf32>
    tpu.vector_store %arg10[%c0_51, %c0_52, %c0_53], %92 {strides = array<i32>} : memref<2x8x32xf32, #tpu.memory_space<vmem>>, vector<1x8x32xf32>,
    %93 = vector.extract_strided_slice %12 {offsets = [8, 0], sizes = [8, 8], strides = [1, 1]} : vector<16x32xf32> to vector<8x8xf32>
    %94 = vector.extract_strided_slice %16 {offsets = [8, 0], sizes = [8, 8], strides = [1, 1]} : vector<16x32xf32> to vector<8x8xf32>
    %95 = vector.extract_strided_slice %20 {offsets = [8, 0], sizes = [8, 8], strides = [1, 1]} : vector<16x32xf32> to vector<8x8xf32>
    %cst_54 = arith.constant dense<0.000000e+00> : vector<8x8xf32>
    %96 = tpu.matmul %93, %94, %cst_54 {dimension_numbers = #tpu.dot_dimension_numbers<[1], [1], [0], [0], [0, 0, 1, 0], [], []>} : vector<8x8xf32>, vector<8x8xf32>, vector<8x8xf32> -> vector<8x8xf32>
    %cst_55 = arith.constant dense<0xFF800000> : vector<8xf32>
    %97 = vector.multi_reduction <maximumf>, %96, %cst_55 [1] : vector<8x8xf32> to vector<8xf32>
    %98 = vector.shape_cast %97 : vector<8xf32> to vector<8x1xf32>
    %99 = vector.broadcast %98 : vector<8x1xf32> to vector<8x8xf32>
    %100 = arith.subf %96, %99 : vector<8x8xf32>
    %101 = math.exp %100 : vector<8x8xf32>
    %cst_56 = arith.constant dense<0.000000e+00> : vector<8xf32>
    %102 = vector.multi_reduction <add>, %101, %cst_56 [1] : vector<8x8xf32> to vector<8xf32>
    %103 = vector.shape_cast %102 : vector<8xf32> to vector<8x1xf32>
    %104 = vector.broadcast %103 : vector<8x1xf32> to vector<8x8xf32>
    %105 = arith.divf %101, %104 : vector<8x8xf32>
    %c0_57 = arith.constant 0 : index
    %c1_58 = arith.constant 1 : index
    %c0_59 = arith.constant 0 : index
    %c0_60 = arith.constant 0 : index
    %106 = vector.load %arg11[%c0_57, %c1_58, %c0_59, %c0_60] : memref<4x2x8x8xf32, #tpu.memory_space<vmem>>, vector<1x1x8x8xf32>
    %107 = vector.shape_cast %106 : vector<1x1x8x8xf32> to vector<8x8xf32>
    %108 = vector.shape_cast %105 : vector<8x8xf32> to vector<1x1x8x8xf32>
    tpu.vector_store %arg11[%c0_57, %c1_58, %c0_59, %c0_60], %108 {strides = array<i32>} : memref<4x2x8x8xf32, #tpu.memory_space<vmem>>, vector<1x1x8x8xf32>,
    %cst_61 = arith.constant dense<0.000000e+00> : vector<8x8xf32>
    %109 = tpu.matmul %105, %95, %cst_61 {dimension_numbers = #tpu.dot_dimension_numbers<[1], [0], [0], [1], [0, 0, 1, 1], [], []>} : vector<8x8xf32>, vector<8x8xf32>, vector<8x8xf32> -> vector<8x8xf32>
    %110 = vector.extract_strided_slice %12 {offsets = [8, 8], sizes = [8, 8], strides = [1, 1]} : vector<16x32xf32> to vector<8x8xf32>
    %111 = vector.extract_strided_slice %16 {offsets = [8, 8], sizes = [8, 8], strides = [1, 1]} : vector<16x32xf32> to vector<8x8xf32>
    %112 = vector.extract_strided_slice %20 {offsets = [8, 8], sizes = [8, 8], strides = [1, 1]} : vector<16x32xf32> to vector<8x8xf32>
    %cst_62 = arith.constant dense<0.000000e+00> : vector<8x8xf32>
    %113 = tpu.matmul %110, %111, %cst_62 {dimension_numbers = #tpu.dot_dimension_numbers<[1], [1], [0], [0], [0, 0, 1, 0], [], []>} : vector<8x8xf32>, vector<8x8xf32>, vector<8x8xf32> -> vector<8x8xf32>
    %cst_63 = arith.constant dense<0xFF800000> : vector<8xf32>
    %114 = vector.multi_reduction <maximumf>, %113, %cst_63 [1] : vector<8x8xf32> to vector<8xf32>
    %115 = vector.shape_cast %114 : vector<8xf32> to vector<8x1xf32>
    %116 = vector.broadcast %115 : vector<8x1xf32> to vector<8x8xf32>
    %117 = arith.subf %113, %116 : vector<8x8xf32>
    %118 = math.exp %117 : vector<8x8xf32>
    %cst_64 = arith.constant dense<0.000000e+00> : vector<8xf32>
    %119 = vector.multi_reduction <add>, %118, %cst_64 [1] : vector<8x8xf32> to vector<8xf32>
    %120 = vector.shape_cast %119 : vector<8xf32> to vector<8x1xf32>
    %121 = vector.broadcast %120 : vector<8x1xf32> to vector<8x8xf32>
    %122 = arith.divf %118, %121 : vector<8x8xf32>
    %c1_65 = arith.constant 1 : index
    %c1_66 = arith.constant 1 : index
    %c0_67 = arith.constant 0 : index
    %c0_68 = arith.constant 0 : index
    %123 = vector.load %arg11[%c1_65, %c1_66, %c0_67, %c0_68] : memref<4x2x8x8xf32, #tpu.memory_space<vmem>>, vector<1x1x8x8xf32>
    %124 = vector.shape_cast %123 : vector<1x1x8x8xf32> to vector<8x8xf32>
    %125 = vector.shape_cast %122 : vector<8x8xf32> to vector<1x1x8x8xf32>
    tpu.vector_store %arg11[%c1_65, %c1_66, %c0_67, %c0_68], %125 {strides = array<i32>} : memref<4x2x8x8xf32, #tpu.memory_space<vmem>>, vector<1x1x8x8xf32>,
    %cst_69 = arith.constant dense<0.000000e+00> : vector<8x8xf32>
    %126 = tpu.matmul %122, %112, %cst_69 {dimension_numbers = #tpu.dot_dimension_numbers<[1], [0], [0], [1], [0, 0, 1, 1], [], []>} : vector<8x8xf32>, vector<8x8xf32>, vector<8x8xf32> -> vector<8x8xf32>
    %127 = vector.extract_strided_slice %12 {offsets = [8, 16], sizes = [8, 8], strides = [1, 1]} : vector<16x32xf32> to vector<8x8xf32>
    %128 = vector.extract_strided_slice %16 {offsets = [8, 16], sizes = [8, 8], strides = [1, 1]} : vector<16x32xf32> to vector<8x8xf32>
    %129 = vector.extract_strided_slice %20 {offsets = [8, 16], sizes = [8, 8], strides = [1, 1]} : vector<16x32xf32> to vector<8x8xf32>
    %cst_70 = arith.constant dense<0.000000e+00> : vector<8x8xf32>
    %130 = tpu.matmul %127, %128, %cst_70 {dimension_numbers = #tpu.dot_dimension_numbers<[1], [1], [0], [0], [0, 0, 1, 0], [], []>} : vector<8x8xf32>, vector<8x8xf32>, vector<8x8xf32> -> vector<8x8xf32>
    %cst_71 = arith.constant dense<0xFF800000> : vector<8xf32>
    %131 = vector.multi_reduction <maximumf>, %130, %cst_71 [1] : vector<8x8xf32> to vector<8xf32>
    %132 = vector.shape_cast %131 : vector<8xf32> to vector<8x1xf32>
    %133 = vector.broadcast %132 : vector<8x1xf32> to vector<8x8xf32>
    %134 = arith.subf %130, %133 : vector<8x8xf32>
    %135 = math.exp %134 : vector<8x8xf32>
    %cst_72 = arith.constant dense<0.000000e+00> : vector<8xf32>
    %136 = vector.multi_reduction <add>, %135, %cst_72 [1] : vector<8x8xf32> to vector<8xf32>
    %137 = vector.shape_cast %136 : vector<8xf32> to vector<8x1xf32>
    %138 = vector.broadcast %137 : vector<8x1xf32> to vector<8x8xf32>
    %139 = arith.divf %135, %138 : vector<8x8xf32>
    %c2_73 = arith.constant 2 : index
    %c1_74 = arith.constant 1 : index
    %c0_75 = arith.constant 0 : index
    %c0_76 = arith.constant 0 : index
    %140 = vector.load %arg11[%c2_73, %c1_74, %c0_75, %c0_76] : memref<4x2x8x8xf32, #tpu.memory_space<vmem>>, vector<1x1x8x8xf32>
    %141 = vector.shape_cast %140 : vector<1x1x8x8xf32> to vector<8x8xf32>
    %142 = vector.shape_cast %139 : vector<8x8xf32> to vector<1x1x8x8xf32>
    tpu.vector_store %arg11[%c2_73, %c1_74, %c0_75, %c0_76], %142 {strides = array<i32>} : memref<4x2x8x8xf32, #tpu.memory_space<vmem>>, vector<1x1x8x8xf32>,
    %cst_77 = arith.constant dense<0.000000e+00> : vector<8x8xf32>
    %143 = tpu.matmul %139, %129, %cst_77 {dimension_numbers = #tpu.dot_dimension_numbers<[1], [0], [0], [1], [0, 0, 1, 1], [], []>} : vector<8x8xf32>, vector<8x8xf32>, vector<8x8xf32> -> vector<8x8xf32>
    %144 = vector.extract_strided_slice %12 {offsets = [8, 24], sizes = [8, 8], strides = [1, 1]} : vector<16x32xf32> to vector<8x8xf32>
    %145 = vector.extract_strided_slice %16 {offsets = [8, 24], sizes = [8, 8], strides = [1, 1]} : vector<16x32xf32> to vector<8x8xf32>
    %146 = vector.extract_strided_slice %20 {offsets = [8, 24], sizes = [8, 8], strides = [1, 1]} : vector<16x32xf32> to vector<8x8xf32>
    %cst_78 = arith.constant dense<0.000000e+00> : vector<8x8xf32>
    %147 = tpu.matmul %144, %145, %cst_78 {dimension_numbers = #tpu.dot_dimension_numbers<[1], [1], [0], [0], [0, 0, 1, 0], [], []>} : vector<8x8xf32>, vector<8x8xf32>, vector<8x8xf32> -> vector<8x8xf32>
    %cst_79 = arith.constant dense<0xFF800000> : vector<8xf32>
    %148 = vector.multi_reduction <maximumf>, %147, %cst_79 [1] : vector<8x8xf32> to vector<8xf32>
    %149 = vector.shape_cast %148 : vector<8xf32> to vector<8x1xf32>
    %150 = vector.broadcast %149 : vector<8x1xf32> to vector<8x8xf32>
    %151 = arith.subf %147, %150 : vector<8x8xf32>
    %152 = math.exp %151 : vector<8x8xf32>
    %cst_80 = arith.constant dense<0.000000e+00> : vector<8xf32>
    %153 = vector.multi_reduction <add>, %152, %cst_80 [1] : vector<8x8xf32> to vector<8xf32>
    %154 = vector.shape_cast %153 : vector<8xf32> to vector<8x1xf32>
    %155 = vector.broadcast %154 : vector<8x1xf32> to vector<8x8xf32>
    %156 = arith.divf %152, %155 : vector<8x8xf32>
    %c3_81 = arith.constant 3 : index
    %c1_82 = arith.constant 1 : index
    %c0_83 = arith.constant 0 : index
    %c0_84 = arith.constant 0 : index
    %157 = vector.load %arg11[%c3_81, %c1_82, %c0_83, %c0_84] : memref<4x2x8x8xf32, #tpu.memory_space<vmem>>, vector<1x1x8x8xf32>
    %158 = vector.shape_cast %157 : vector<1x1x8x8xf32> to vector<8x8xf32>
    %159 = vector.shape_cast %156 : vector<8x8xf32> to vector<1x1x8x8xf32>
    tpu.vector_store %arg11[%c3_81, %c1_82, %c0_83, %c0_84], %159 {strides = array<i32>} : memref<4x2x8x8xf32, #tpu.memory_space<vmem>>, vector<1x1x8x8xf32>,
    %cst_85 = arith.constant dense<0.000000e+00> : vector<8x8xf32>
    %160 = tpu.matmul %156, %146, %cst_85 {dimension_numbers = #tpu.dot_dimension_numbers<[1], [0], [0], [1], [0, 0, 1, 1], [], []>} : vector<8x8xf32>, vector<8x8xf32>, vector<8x8xf32> -> vector<8x8xf32>
    %161 = tpu.concatenate %109, %126, %143, %160 in 1 : vector<8x8xf32>, vector<8x8xf32>, vector<8x8xf32>, vector<8x8xf32> -> vector<8x32xf32>
    %c1_86 = arith.constant 1 : index
    %c0_87 = arith.constant 0 : index
    %c0_88 = arith.constant 0 : index
    %162 = vector.load %arg10[%c1_86, %c0_87, %c0_88] : memref<2x8x32xf32, #tpu.memory_space<vmem>>, vector<1x8x32xf32>
    %163 = vector.shape_cast %162 : vector<1x8x32xf32> to vector<8x32xf32>
    %164 = vector.shape_cast %161 : vector<8x32xf32> to vector<1x8x32xf32>
    tpu.vector_store %arg10[%c1_86, %c0_87, %c0_88], %164 {strides = array<i32>} : memref<2x8x32xf32, #tpu.memory_space<vmem>>, vector<1x8x32xf32>,
    return
  }
  func.func @transform_0(%arg0: i32) -> (i32, i32, i32) {
    %c0_i32 = arith.constant 0 : i32
    %c0_i32_0 = arith.constant 0 : i32
    %c0_i32_1 = arith.constant 0 : i32
    return %arg0, %c0_i32, %c0_i32_0 : i32, i32, i32
  }
  func.func @transform_1(%arg0: i32) -> (i32, i32, i32) {
    %c0_i32 = arith.constant 0 : i32
    %c0_i32_0 = arith.constant 0 : i32
    %c0_i32_1 = arith.constant 0 : i32
    return %arg0, %c0_i32, %c0_i32_0 : i32, i32, i32
  }
  func.func @transform_2(%arg0: i32) -> (i32, i32, i32) {
    %c0_i32 = arith.constant 0 : i32
    %c0_i32_0 = arith.constant 0 : i32
    %c0_i32_1 = arith.constant 0 : i32
    return %arg0, %c0_i32, %c0_i32_0 : i32, i32, i32
  }
  func.func @transform_3(%arg0: i32) -> (i32, i32) {
    %c0_i32 = arith.constant 0 : i32
    %c0_i32_0 = arith.constant 0 : i32
    %c0_i32_1 = arith.constant 0 : i32
    return %c0_i32, %c0_i32_0 : i32, i32
  }
  func.func @transform_4(%arg0: i32) -> (i32, i32) {
    %c0_i32 = arith.constant 0 : i32
    %c0_i32_0 = arith.constant 0 : i32
    %c0_i32_1 = arith.constant 0 : i32
    return %c0_i32, %c0_i32_0 : i32, i32
  }
  func.func @transform_5(%arg0: i32) -> (i32, i32) {
    %c0_i32 = arith.constant 0 : i32
    %c0_i32_0 = arith.constant 0 : i32
    %c0_i32_1 = arith.constant 0 : i32
    return %c0_i32, %c0_i32_0 : i32, i32
  }
  func.func @transform_6(%arg0: i32) -> (i32, i32) {
    %c0_i32 = arith.constant 0 : i32
    %c0_i32_0 = arith.constant 0 : i32
    %c0_i32_1 = arith.constant 0 : i32
    return %c0_i32, %c0_i32_0 : i32, i32
  }
  func.func @transform_7(%arg0: i32) -> (i32, i32) {
    %c0_i32 = arith.constant 0 : i32
    %c0_i32_0 = arith.constant 0 : i32
    %c0_i32_1 = arith.constant 0 : i32
    return %c0_i32, %c0_i32_0 : i32, i32
  }
  func.func @transform_8(%arg0: i32) -> (i32, i32) {
    %c0_i32 = arith.constant 0 : i32
    %c0_i32_0 = arith.constant 0 : i32
    %c0_i32_1 = arith.constant 0 : i32
    return %c0_i32, %c0_i32_0 : i32, i32
  }
  func.func @transform_9(%arg0: i32) -> (i32, i32, i32) {
    %c0_i32 = arith.constant 0 : i32
    %c0_i32_0 = arith.constant 0 : i32
    %c0_i32_1 = arith.constant 0 : i32
    return %arg0, %c0_i32, %c0_i32_0 : i32, i32, i32
  }
  func.func @transform_10(%arg0: i32) -> (i32, i32, i32, i32) {
    %c0_i32 = arith.constant 0 : i32
    %c0_i32_0 = arith.constant 0 : i32
    %c0_i32_1 = arith.constant 0 : i32
    %c0_i32_2 = arith.constant 0 : i32
    return %c0_i32, %arg0, %c0_i32_0, %c0_i32_1 : i32, i32, i32, i32
  }
}

</mosaic_0001>

<llo_original>
// kernel: tpu_custom_call.1
$region0: #{tpu_custom_call.1}
  #allocation0 [shape = 'u32[]', space=smem, size = 0x4, offset = 0x4, fixed_abs, tag = 'smem constant byte address 0x4 - core index']
  #allocation1 [shape = 'u32[144,128]{1,0:T(1,128)}', space=vmem, size = 0x12000, scoped, tag = 'internal scratch']
  %s0 = inlined_call_operand.hbm [shape: f32[2,8,32], index: 0, kind: input, shape index: {}]
  %s1 = inlined_call_operand.hbm [shape: f32[2,8,32], index: 1, kind: input, shape index: {}]
  %s2 = inlined_call_operand.hbm [shape: f32[2,8,32], index: 2, kind: input, shape index: {}]
  %s3 = inlined_call_operand.hbm [shape: f32[32,32], index: 3, kind: input, shape index: {}]
  %s4 = inlined_call_operand.hbm [shape: f32[32,32], index: 4, kind: input, shape index: {}]
  %s5 = inlined_call_operand.hbm [shape: f32[32,32], index: 5, kind: input, shape index: {}]
  %s6 = inlined_call_operand.vmem [shape: f32[1,32], index: 6, kind: input, shape index: {}]
  %s7 = inlined_call_operand.vmem [shape: f32[1,32], index: 7, kind: input, shape index: {}]
  %s8 = inlined_call_operand.vmem [shape: f32[1,32], index: 8, kind: input, shape index: {}]
  %s9 = inlined_call_operand.hbm [shape: f32[2,8,32], index: 9, kind: output, shape index: {0}]
  %s10 = inlined_call_operand.hbm [shape: f32[4,2,8,8], index: 10, kind: output, shape index: {1}]
  %11 = xla_tuple %s9, %s10
  %s12 = sld [smem:[#allocation0]]
  $region78: #{tpu_custom_call.1} parent=0
    _
  %s14 = ssub.s32 1, %s12
  %s15 = scalar_select 0, %s14, %s12
  $region1: #{tpu_custom_call.1} parent=0
    #allocation2 [shape = 'u8[8192]{0}', space=vmem, size = 0x2000, scoped, tag = 'input window, operand 0, single buffered']
    #allocation3 [shape = 's32[1]{0}', space=sflag, size = 0x4, scoped, tag = 'scoped memory for tpu_custom_call.1']
    #allocation4 [shape = 's32[1]{0}', space=sflag, size = 0x4, scoped, tag = 'scoped memory for tpu_custom_call.1']
    #allocation5 [shape = 'u8[8192]{0}', space=vmem, size = 0x2000, scoped, tag = 'input window, operand 1, single buffered']
    #allocation6 [shape = 's32[1]{0}', space=sflag, size = 0x4, scoped, tag = 'scoped memory for tpu_custom_call.1']
    #allocation7 [shape = 'u8[8192]{0}', space=vmem, size = 0x2000, scoped, tag = 'input window, operand 2, single buffered']
    #allocation8 [shape = 'u8[16384]{0}', space=vmem, size = 0x4000, scoped, tag = 'input window, operand 3, single buffered']
    #allocation9 [shape = 's32[1]{0}', space=sflag, size = 0x4, scoped, tag = 'scoped memory for tpu_custom_call.1']
    #allocation10 [shape = 'u8[16384]{0}', space=vmem, size = 0x4000, scoped, tag = 'input window, operand 4, single buffered']
    #allocation11 [shape = 'u8[16384]{0}', space=vmem, size = 0x4000, scoped, tag = 'input window, operand 5, single buffered']
    #allocation12 [shape = 's32[1]{0}', space=sflag, size = 0x4, scoped, tag = 'scoped memory for tpu_custom_call.1']
    #allocation13 [shape = 'u8[8192]{0}', space=vmem, size = 0x2000, scoped, tag = 'output window, operand 0, single buffered']
    #allocation14 [shape = 'u8[32768]{0}', space=vmem, size = 0x8000, scoped, tag = 'output window, operand 1, single buffered']
    #allocation15 [shape = 's32[1]{0}', space=sflag, size = 0x4, scoped, tag = 'scoped memory for tpu_custom_call.1']
    %16 = vsyncpa [#allocation3], 0
    %17 = vsyncpa [#allocation6], 0
    %18 = vsyncpa [#allocation9], 0
    %19 = vsyncpa [#allocation12], 0
    %20 = vsyncpa [#allocation4], 0
    %21 = vsyncpa [#allocation15], 0
    // Predicated region
    $region2: #{tpu_custom_call.1} parent=1 // pred_check
      _
    $region3: #{tpu_custom_call.1} parent=1 // pred_check_branch
      %23 = sbr.rel (0) target = $region5
    $region4: #{tpu_custom_call.1} parent=1 // pred_region
      %s25 = ssub.s32 256, 256
      %26 = vsyncadd [#allocation3], %s25
      %s27 = sshll.u32 [#allocation2], 4
      %s28 = int_to_ptr.vmem [resolvable:$true] %s27
      %33 = dma.hbm_to_vmem [thread:$0]  %s0, 256, %s28, [#allocation3], 128, 128, 8
    $region5: #{tpu_custom_call.1} parent=1 // pred_fallthru
      _
    // Predicated region
    $region6: #{tpu_custom_call.1} parent=1 // pred_check
      _
    $region7: #{tpu_custom_call.1} parent=1 // pred_check_branch
      %35 = sbr.rel (0) target = $region9
    $region8: #{tpu_custom_call.1} parent=1 // pred_region
      %s37 = ssub.s32 256, 256
      %38 = vsyncadd [#allocation6], %s37
      %s39 = sshll.u32 [#allocation5], 4
      %s40 = int_to_ptr.vmem [resolvable:$true] %s39
      %45 = dma.hbm_to_vmem [thread:$0]  %s1, 256, %s40, [#allocation6], 128, 128, 8
    $region9: #{tpu_custom_call.1} parent=1 // pred_fallthru
      _
    // Predicated region
    $region10: #{tpu_custom_call.1} parent=1 // pred_check
      _
    $region11: #{tpu_custom_call.1} parent=1 // pred_check_branch
      %47 = sbr.rel (0) target = $region13
    $region12: #{tpu_custom_call.1} parent=1 // pred_region
      %s49 = ssub.s32 256, 256
      %50 = vsyncadd [#allocation6], %s49
      %s51 = sshll.u32 [#allocation7], 4
      %s52 = int_to_ptr.vmem [resolvable:$true] %s51
      %57 = dma.hbm_to_vmem [thread:$0]  %s2, 256, %s52, [#allocation6], 128, 128, 8
    $region13: #{tpu_custom_call.1} parent=1 // pred_fallthru
      _
    // Predicated region
    $region14: #{tpu_custom_call.1} parent=1 // pred_check
      _
    $region15: #{tpu_custom_call.1} parent=1 // pred_check_branch
      %59 = sbr.rel (0) target = $region17
    $region16: #{tpu_custom_call.1} parent=1 // pred_region
      %s61 = ssub.s32 512, 512
      %62 = vsyncadd [#allocation9], %s61
      %s63 = sshll.u32 [#allocation8], 4
      %s64 = int_to_ptr.vmem [resolvable:$true] %s63
      %69 = dma.hbm_to_vmem [thread:$0]  %s3, 512, %s64, [#allocation9], 128, 128, 8
    $region17: #{tpu_custom_call.1} parent=1 // pred_fallthru
      _
    // Predicated region
    $region18: #{tpu_custom_call.1} parent=1 // pred_check
      _
    $region19: #{tpu_custom_call.1} parent=1 // pred_check_branch
      %71 = sbr.rel (0) target = $region21
    $region20: #{tpu_custom_call.1} parent=1 // pred_region
      %s73 = ssub.s32 512, 512
      %74 = vsyncadd [#allocation9], %s73
      %s75 = sshll.u32 [#allocation10], 4
      %s76 = int_to_ptr.vmem [resolvable:$true] %s75
      %81 = dma.hbm_to_vmem [thread:$0]  %s4, 512, %s76, [#allocation9], 128, 128, 8
    $region21: #{tpu_custom_call.1} parent=1 // pred_fallthru
      _
    // Predicated region
    $region22: #{tpu_custom_call.1} parent=1 // pred_check
      _
    $region23: #{tpu_custom_call.1} parent=1 // pred_check_branch
      %83 = sbr.rel (0) target = $region25
    $region24: #{tpu_custom_call.1} parent=1 // pred_region
      %s85 = ssub.s32 512, 512
      %86 = vsyncadd [#allocation12], %s85
      %s87 = sshll.u32 [#allocation11], 4
      %s88 = int_to_ptr.vmem [resolvable:$true] %s87
      %93 = dma.hbm_to_vmem [thread:$0]  %s5, 512, %s88, [#allocation12], 128, 128, 8
    $region25: #{tpu_custom_call.1} parent=1 // pred_fallthru
      _
    // Predicated region
    $region26: #{tpu_custom_call.1} parent=1 // pred_check
      _
    $region27: #{tpu_custom_call.1} parent=1 // pred_check_branch
      %95 = sbr.rel (0) target = $region29
    $region28: #{tpu_custom_call.1} parent=1 // pred_region
      _
    $region29: #{tpu_custom_call.1} parent=1 // pred_fallthru
      _
    // Predicated region
    $region30: #{tpu_custom_call.1} parent=1 // pred_check
      _
    $region31: #{tpu_custom_call.1} parent=1 // pred_check_branch
      %97 = sbr.rel (0) target = $region33
    $region32: #{tpu_custom_call.1} parent=1 // pred_region
      _
    $region33: #{tpu_custom_call.1} parent=1 // pred_fallthru
      _
    // Predicated region
    $region34: #{tpu_custom_call.1} parent=1 // pred_check
      _
    $region35: #{tpu_custom_call.1} parent=1 // pred_check_branch
      %99 = sbr.rel (0) target = $region37
    $region36: #{tpu_custom_call.1} parent=1 // pred_region
      _
    $region37: #{tpu_custom_call.1} parent=1 // pred_fallthru
      _
    // Predicated region
    $region38: #{tpu_custom_call.1} parent=1 // pred_check
      _
    $region39: #{tpu_custom_call.1} parent=1 // pred_check_branch
      %101 = sbr.rel (0) target = $region41
    $region40: #{tpu_custom_call.1} parent=1 // pred_region
      %102 = dma.done [#allocation3], 256
    $region41: #{tpu_custom_call.1} parent=1 // pred_fallthru
      _
    // Predicated region
    $region42: #{tpu_custom_call.1} parent=1 // pred_check
      _
    $region43: #{tpu_custom_call.1} parent=1 // pred_check_branch
      %104 = sbr.rel (0) target = $region45
    $region44: #{tpu_custom_call.1} parent=1 // pred_region
      %105 = dma.done [#allocation6], 256
    $region45: #{tpu_custom_call.1} parent=1 // pred_fallthru
      _
    // Predicated region
    $region46: #{tpu_custom_call.1} parent=1 // pred_check
      _
    $region47: #{tpu_custom_call.1} parent=1 // pred_check_branch
      %107 = sbr.rel (0) target = $region49
    $region48: #{tpu_custom_call.1} parent=1 // pred_region
      %108 = dma.done [#allocation6], 256
    $region49: #{tpu_custom_call.1} parent=1 // pred_fallthru
      _
    // Predicated region
    $region50: #{tpu_custom_call.1} parent=1 // pred_check
      _
    $region51: #{tpu_custom_call.1} parent=1 // pred_check_branch
      %110 = sbr.rel (0) target = $region53
    $region52: #{tpu_custom_call.1} parent=1 // pred_region
      %111 = dma.done [#allocation9], 512
    $region53: #{tpu_custom_call.1} parent=1 // pred_fallthru
      _
    // Predicated region
    $region54: #{tpu_custom_call.1} parent=1 // pred_check
      _
    $region55: #{tpu_custom_call.1} parent=1 // pred_check_branch
      %113 = sbr.rel (0) target = $region57
    $region56: #{tpu_custom_call.1} parent=1 // pred_region
      %114 = dma.done [#allocation9], 512
    $region57: #{tpu_custom_call.1} parent=1 // pred_fallthru
      _
    // Predicated region
    $region58: #{tpu_custom_call.1} parent=1 // pred_check
      _
    $region59: #{tpu_custom_call.1} parent=1 // pred_check_branch
      %116 = sbr.rel (0) target = $region61
    $region60: #{tpu_custom_call.1} parent=1 // pred_region
      %117 = dma.done [#allocation12], 512
    $region61: #{tpu_custom_call.1} parent=1 // pred_fallthru
      _
    %v118 = vld [vmem:[#allocation2] sm:$0xff]
    %v119 = vld [vmem:[#allocation2 + $0x8] sm:$0xff]
    %v120 = vld [vmem:[#allocation5] sm:$0xff]
    %v121 = vld [vmem:[#allocation5 + $0x8] sm:$0xff]
    %v122 = vld [vmem:[#allocation7] sm:$0xff]
    %v123 = vld [vmem:[#allocation7 + $0x8] sm:$0xff]
    %v124 = vld [vmem:[#allocation8] sm:$0xff]
    %v125 = vld [vmem:[#allocation8 + $0x8] sm:$0xff]
    %v126 = vld [vmem:[#allocation8 + $0x10] sm:$0xff]
    %v127 = vld [vmem:[#allocation8 + $0x18] sm:$0xff]
    %v128 = vld [vmem:[#allocation10] sm:$0xff]
    %v129 = vld [vmem:[#allocation10 + $0x8] sm:$0xff]
    %v130 = vld [vmem:[#allocation10 + $0x10] sm:$0xff]
    %v131 = vld [vmem:[#allocation10 + $0x18] sm:$0xff]
    %v132 = vld [vmem:[#allocation11] sm:$0xff]
    %v133 = vld [vmem:[#allocation11 + $0x8] sm:$0xff]
    %v134 = vld [vmem:[#allocation11 + $0x10] sm:$0xff]
    %v135 = vld [vmem:[#allocation11 + $0x18] sm:$0xff]
    %v136 = vld [vmem:[%s6] sm:$0x1]
    %v138 = vlaneseq
    %v139 = vshrl.u32 %v138, 7
    %v140 = vsub.s32 0, %v139
    %v141 = vrot.slane %v136, %v140
    %vm143 = vcmask 261120
    %v145 = vsel %vm143, %v118, 0
    %v148 = vsel %vm143, %v119, 0
    %150 = vmatprep.subr.mxu0 0.0
    %151 = vmatpush1.msra.mxu0 %v124
    %152 = vmatprep.subr.mxu0 0.0
    %153 = vmatpush1.msra.mxu0 %v125
    %154 = vmatprep.subr.mxu0 0.0
    %155 = vmatpush1.msra.mxu0 %v126
    %156 = vmatprep.subr.mxu0 0.0
    %157 = vmatpush1.msra.mxu0 %v127
    %158 = vmatprep.subr.mxu0 0.0
    %159 = vmatpush1.msra.mxu0 0.0
    %160 = vmatprep.subr.mxu0 0.0
    %161 = vmatpush1.msra.mxu0 0.0
    %162 = vmatprep.subr.mxu0 0.0
    %163 = vmatpush1.msra.mxu0 0.0
    %164 = vmatprep.subr.mxu0 0.0
    %165 = vmatpush1.msra.mxu0 0.0
    %166 = vmatprep.subr.mxu0 0.0
    %167 = vmatpush1.msra.mxu0 0.0
    %168 = vmatprep.subr.mxu0 0.0
    %169 = vmatpush1.msra.mxu0 0.0
    %170 = vmatprep.subr.mxu0 0.0
    %171 = vmatpush1.msra.mxu0 0.0
    %172 = vmatprep.subr.mxu0 0.0
    %173 = vmatpush1.msra.mxu0 0.0
    %174 = vmatprep.subr.mxu0 0.0
    %175 = vmatpush1.msra.mxu0 0.0
    %176 = vmatprep.subr.mxu0 0.0
    %177 = vmatpush1.msra.mxu0 0.0
    %178 = vmatprep.subr.mxu0 0.0
    %179 = vmatpush1.msra.mxu0 0.0
    %180 = vmatprep.subr.mxu0 0.0
    %181 = vmatpush1.msra.mxu0 0.0
    %182 = vmatprep.subr.mxu0 0.0
    %183 = vmatpush1.msra.mxu0 0.0
    %184 = vmatprep.subr.mxu0 0.0
    %185 = vmatpush1.msra.mxu0 0.0
    %186 = vmatprep.subr.mxu0 0.0
    %187 = vmatpush1.msra.mxu0 0.0
    %188 = vmatprep.subr.mxu0 0.0
    %189 = vmatpush1.msra.mxu0 0.0
    %190 = vmatprep.subr.mxu0 0.0
    %191 = vmatpush1.msra.mxu0 0.0
    %192 = vmatprep.subr.mxu0 0.0
    %193 = vmatpush1.msra.mxu0 0.0
    %194 = vmatprep.subr.mxu0 0.0
    %195 = vmatpush1.msra.mxu0 0.0
    %196 = vmatprep.subr.mxu0 0.0
    %197 = vmatpush1.msra.mxu0 0.0
    %198 = vmatprep.subr.mxu0 0.0
    %199 = vmatpush1.msra.mxu0 0.0
    %200 = vmatprep.subr.mxu0 0.0
    %201 = vmatpush1.msra.mxu0 0.0
    %202 = vmatprep.subr.mxu0 0.0
    %203 = vmatpush1.msra.mxu0 0.0
    %204 = vmatprep.subr.mxu0 0.0
    %205 = vmatpush1.msra.mxu0 0.0
    %206 = vmatprep.subr.mxu0 0.0
    %207 = vmatpush1.msra.mxu0 0.0
    %208 = vmatprep.subr.mxu0 0.0
    %209 = vmatpush1.msra.mxu0 0.0
    %210 = vmatprep.subr.mxu0 0.0
    %211 = vmatpush1.msra.mxu0 0.0
    %212 = vmatprep.subr.mxu0 0.0
    %213 = vmatpush1.msra.mxu0 0.0
    %214 = vmatprep.mubr.f32.mxu0 0.0
    %215 = vmatmul.mubr.f32.gmra.mrb[0].mxu0 %v145
    %v216 = vpop.f32.mrb[0].mxu0
    %v217 = vadd.f32 %v141, %v216
    %v218 = vpop.f32.mrb[0].mxu0
    %219 = vmatprep.mubr.f32.mxu0 0.0
    %220 = vmatmul.mubr.f32.gmra.mrb[0].mxu0 %v148
    %v221 = vpop.f32.mrb[0].mxu0
    %v222 = vadd.f32 %v141, %v221
    %v223 = vpop.f32.mrb[0].mxu0
    %224 = vdwg.mxu0
    %v225 = vld [vmem:[%s7] sm:$0x1]
    %v227 = vlaneseq
    %v228 = vshrl.u32 %v227, 7
    %v229 = vsub.s32 0, %v228
    %v230 = vrot.slane %v225, %v229
    %v233 = vsel %vm143, %v120, 0
    %v236 = vsel %vm143, %v121, 0
    %238 = vmatprep.subr.mxu0 0.0
    %239 = vmatpush1.msra.mxu0 %v128
    %240 = vmatprep.subr.mxu0 0.0
    %241 = vmatpush1.msra.mxu0 %v129
    %242 = vmatprep.subr.mxu0 0.0
    %243 = vmatpush1.msra.mxu0 %v130
    %244 = vmatprep.subr.mxu0 0.0
    %245 = vmatpush1.msra.mxu0 %v131
    %246 = vmatprep.subr.mxu0 0.0
    %247 = vmatpush1.msra.mxu0 0.0
    %248 = vmatprep.subr.mxu0 0.0
    %249 = vmatpush1.msra.mxu0 0.0
    %250 = vmatprep.subr.mxu0 0.0
    %251 = vmatpush1.msra.mxu0 0.0
    %252 = vmatprep.subr.mxu0 0.0
    %253 = vmatpush1.msra.mxu0 0.0
    %254 = vmatprep.subr.mxu0 0.0
    %255 = vmatpush1.msra.mxu0 0.0
    %256 = vmatprep.subr.mxu0 0.0
    %257 = vmatpush1.msra.mxu0 0.0
    %258 = vmatprep.subr.mxu0 0.0
    %259 = vmatpush1.msra.mxu0 0.0
    %260 = vmatprep.subr.mxu0 0.0
    %261 = vmatpush1.msra.mxu0 0.0
    %262 = vmatprep.subr.mxu0 0.0
    %263 = vmatpush1.msra.mxu0 0.0
    %264 = vmatprep.subr.mxu0 0.0
    %265 = vmatpush1.msra.mxu0 0.0
    %266 = vmatprep.subr.mxu0 0.0
    %267 = vmatpush1.msra.mxu0 0.0
    %268 = vmatprep.subr.mxu0 0.0
    %269 = vmatpush1.msra.mxu0 0.0
    %270 = vmatprep.subr.mxu0 0.0
    %271 = vmatpush1.msra.mxu0 0.0
    %272 = vmatprep.subr.mxu0 0.0
    %273 = vmatpush1.msra.mxu0 0.0
    %274 = vmatprep.subr.mxu0 0.0
    %275 = vmatpush1.msra.mxu0 0.0
    %276 = vmatprep.subr.mxu0 0.0
    %277 = vmatpush1.msra.mxu0 0.0
    %278 = vmatprep.subr.mxu0 0.0
    %279 = vmatpush1.msra.mxu0 0.0
    %280 = vmatprep.subr.mxu0 0.0
    %281 = vmatpush1.msra.mxu0 0.0
    %282 = vmatprep.subr.mxu0 0.0
    %283 = vmatpush1.msra.mxu0 0.0
    %284 = vmatprep.subr.mxu0 0.0
    %285 = vmatpush1.msra.mxu0 0.0
    %286 = vmatprep.subr.mxu0 0.0
    %287 = vmatpush1.msra.mxu0 0.0
    %288 = vmatprep.subr.mxu0 0.0
    %289 = vmatpush1.msra.mxu0 0.0
    %290 = vmatprep.subr.mxu0 0.0
    %291 = vmatpush1.msra.mxu0 0.0
    %292 = vmatprep.subr.mxu0 0.0
    %293 = vmatpush1.msra.mxu0 0.0
    %294 = vmatprep.subr.mxu0 0.0
    %295 = vmatpush1.msra.mxu0 0.0
    %296 = vmatprep.subr.mxu0 0.0
    %297 = vmatpush1.msra.mxu0 0.0
    %298 = vmatprep.subr.mxu0 0.0
    %299 = vmatpush1.msra.mxu0 0.0
    %300 = vmatprep.subr.mxu0 0.0
    %301 = vmatpush1.msra.mxu0 0.0
    %302 = vmatprep.mubr.f32.mxu0 0.0
    %303 = vmatmul.mubr.f32.gmra.mrb[0].mxu0 %v233
    %v304 = vpop.f32.mrb[0].mxu0
    %v305 = vadd.f32 %v230, %v304
    %v306 = vpop.f32.mrb[0].mxu0
    %307 = vmatprep.mubr.f32.mxu0 0.0
    %308 = vmatmul.mubr.f32.gmra.mrb[0].mxu0 %v236
    %v309 = vpop.f32.mrb[0].mxu0
    %v310 = vadd.f32 %v230, %v309
    %v311 = vpop.f32.mrb[0].mxu0
    %312 = vdwg.mxu0
    %v313 = vld [vmem:[%s8] sm:$0x1]
    %v315 = vlaneseq
    %v316 = vshrl.u32 %v315, 7
    %v317 = vsub.s32 0, %v316
    %v318 = vrot.slane %v313, %v317
    %v321 = vsel %vm143, %v122, 0
    %v324 = vsel %vm143, %v123, 0
    %326 = vmatprep.subr.mxu0 0.0
    %327 = vmatpush1.msra.mxu0 %v132
    %328 = vmatprep.subr.mxu0 0.0
    %329 = vmatpush1.msra.mxu0 %v133
    %330 = vmatprep.subr.mxu0 0.0
    %331 = vmatpush1.msra.mxu0 %v134
    %332 = vmatprep.subr.mxu0 0.0
    %333 = vmatpush1.msra.mxu0 %v135
    %334 = vmatprep.subr.mxu0 0.0
    %335 = vmatpush1.msra.mxu0 0.0
    %336 = vmatprep.subr.mxu0 0.0
    %337 = vmatpush1.msra.mxu0 0.0
    %338 = vmatprep.subr.mxu0 0.0
    %339 = vmatpush1.msra.mxu0 0.0
    %340 = vmatprep.subr.mxu0 0.0
    %341 = vmatpush1.msra.mxu0 0.0
    %342 = vmatprep.subr.mxu0 0.0
    %343 = vmatpush1.msra.mxu0 0.0
    %344 = vmatprep.subr.mxu0 0.0
    %345 = vmatpush1.msra.mxu0 0.0
    %346 = vmatprep.subr.mxu0 0.0
    %347 = vmatpush1.msra.mxu0 0.0
    %348 = vmatprep.subr.mxu0 0.0
    %349 = vmatpush1.msra.mxu0 0.0
    %350 = vmatprep.subr.mxu0 0.0
    %351 = vmatpush1.msra.mxu0 0.0
    %352 = vmatprep.subr.mxu0 0.0
    %353 = vmatpush1.msra.mxu0 0.0
    %354 = vmatprep.subr.mxu0 0.0
    %355 = vmatpush1.msra.mxu0 0.0
    %356 = vmatprep.subr.mxu0 0.0
    %357 = vmatpush1.msra.mxu0 0.0
    %358 = vmatprep.subr.mxu0 0.0
    %359 = vmatpush1.msra.mxu0 0.0
    %360 = vmatprep.subr.mxu0 0.0
    %361 = vmatpush1.msra.mxu0 0.0
    %362 = vmatprep.subr.mxu0 0.0
    %363 = vmatpush1.msra.mxu0 0.0
    %364 = vmatprep.subr.mxu0 0.0
    %365 = vmatpush1.msra.mxu0 0.0
    %366 = vmatprep.subr.mxu0 0.0
    %367 = vmatpush1.msra.mxu0 0.0
    %368 = vmatprep.subr.mxu0 0.0
    %369 = vmatpush1.msra.mxu0 0.0
    %370 = vmatprep.subr.mxu0 0.0
    %371 = vmatpush1.msra.mxu0 0.0
    %372 = vmatprep.subr.mxu0 0.0
    %373 = vmatpush1.msra.mxu0 0.0
    %374 = vmatprep.subr.mxu0 0.0
    %375 = vmatpush1.msra.mxu0 0.0
    %376 = vmatprep.subr.mxu0 0.0
    %377 = vmatpush1.msra.mxu0 0.0
    %378 = vmatprep.subr.mxu0 0.0
    %379 = vmatpush1.msra.mxu0 0.0
    %380 = vmatprep.subr.mxu0 0.0
    %381 = vmatpush1.msra.mxu0 0.0
    %382 = vmatprep.subr.mxu0 0.0
    %383 = vmatpush1.msra.mxu0 0.0
    %384 = vmatprep.subr.mxu0 0.0
    %385 = vmatpush1.msra.mxu0 0.0
    %386 = vmatprep.subr.mxu0 0.0
    %387 = vmatpush1.msra.mxu0 0.0
    %388 = vmatprep.subr.mxu0 0.0
    %389 = vmatpush1.msra.mxu0 0.0
    %390 = vmatprep.mubr.f32.mxu0 0.0
    %391 = vmatmul.mubr.f32.gmra.mrb[0].mxu0 %v321
    %v392 = vpop.f32.mrb[0].mxu0
    %v393 = vadd.f32 %v318, %v392
    %v394 = vpop.f32.mrb[0].mxu0
    %395 = vmatprep.mubr.f32.mxu0 0.0
    %396 = vmatmul.mubr.f32.gmra.mrb[0].mxu0 %v324
    %v397 = vpop.f32.mrb[0].mxu0
    %v398 = vadd.f32 %v318, %v397
    %v399 = vpop.f32.mrb[0].mxu0
    %400 = vdwg.mxu0
    %vm401 = vcmask 64512
    %v403 = vsel %vm401, %v217, 0
    %v406 = vsel %vm401, %v305, 0
    %408 = vmatprep.subr.mxu0 0.0
    %409 = vmatpush1.xpose.msra.mxu0 %v406
    %410 = vmatprep.subr.mxu0 0.0
    %411 = vmatpush1.xpose.msra.mxu0 0.0
    %412 = vmatprep.subr.mxu0 0.0
    %413 = vmatpush1.xpose.msra.mxu0 0.0
    %414 = vmatprep.subr.mxu0 0.0
    %415 = vmatpush1.xpose.msra.mxu0 0.0
    %416 = vmatprep.subr.mxu0 0.0
    %417 = vmatpush1.xpose.msra.mxu0 0.0
    %418 = vmatprep.subr.mxu0 0.0
    %419 = vmatpush1.xpose.msra.mxu0 0.0
    %420 = vmatprep.subr.mxu0 0.0
    %421 = vmatpush1.xpose.msra.mxu0 0.0
    %422 = vmatprep.subr.mxu0 0.0
    %423 = vmatpush1.xpose.msra.mxu0 0.0
    %424 = vmatprep.subr.mxu0 0.0
    %425 = vmatpush1.xpose.msra.mxu0 0.0
    %426 = vmatprep.subr.mxu0 0.0
    %427 = vmatpush1.xpose.msra.mxu0 0.0
    %428 = vmatprep.subr.mxu0 0.0
    %429 = vmatpush1.xpose.msra.mxu0 0.0
    %430 = vmatprep.subr.mxu0 0.0
    %431 = vmatpush1.xpose.msra.mxu0 0.0
    %432 = vmatprep.subr.mxu0 0.0
    %433 = vmatpush1.xpose.msra.mxu0 0.0
    %434 = vmatprep.subr.mxu0 0.0
    %435 = vmatpush1.xpose.msra.mxu0 0.0
    %436 = vmatprep.subr.mxu0 0.0
    %437 = vmatpush1.xpose.msra.mxu0 0.0
    %438 = vmatprep.subr.mxu0 0.0
    %439 = vmatpush1.xpose.msra.mxu0 0.0
    %440 = vmatprep.subr.mxu0 0.0
    %441 = vmatpush1.xpose.msra.mxu0 0.0
    %442 = vmatprep.subr.mxu0 0.0
    %443 = vmatpush1.xpose.msra.mxu0 0.0
    %444 = vmatprep.subr.mxu0 0.0
    %445 = vmatpush1.xpose.msra.mxu0 0.0
    %446 = vmatprep.subr.mxu0 0.0
    %447 = vmatpush1.xpose.msra.mxu0 0.0
    %448 = vmatprep.subr.mxu0 0.0
    %449 = vmatpush1.xpose.msra.mxu0 0.0
    %450 = vmatprep.subr.mxu0 0.0
    %451 = vmatpush1.xpose.msra.mxu0 0.0
    %452 = vmatprep.subr.mxu0 0.0
    %453 = vmatpush1.xpose.msra.mxu0 0.0
    %454 = vmatprep.subr.mxu0 0.0
    %455 = vmatpush1.xpose.msra.mxu0 0.0
    %456 = vmatprep.subr.mxu0 0.0
    %457 = vmatpush1.xpose.msra.mxu0 0.0
    %458 = vmatprep.subr.mxu0 0.0
    %459 = vmatpush1.xpose.msra.mxu0 0.0
    %460 = vmatprep.subr.mxu0 0.0
    %461 = vmatpush1.xpose.msra.mxu0 0.0
    %462 = vmatprep.subr.mxu0 0.0
    %463 = vmatpush1.xpose.msra.mxu0 0.0
    %464 = vmatprep.subr.mxu0 0.0
    %465 = vmatpush1.xpose.msra.mxu0 0.0
    %466 = vmatprep.subr.mxu0 0.0
    %467 = vmatpush1.xpose.msra.mxu0 0.0
    %468 = vmatprep.subr.mxu0 0.0
    %469 = vmatpush1.xpose.msra.mxu0 0.0
    %470 = vmatprep.subr.mxu0 0.0
    %471 = vmatpush1.xpose.msra.mxu0 0.0
    %472 = vmatprep.mubr.f32.mxu0 0.0
    %473 = vmatmul.mubr.f32.gmra.mrb[0].mxu0 %v403
    %v474 = vpop.f32.mrb[0].mxu0
    %v475 = vadd.f32 0.0, %v474
    %v476 = vpop.f32.mrb[0].mxu0
    %477 = vdwg.mxu0
    %v478 = vsel %vm401, %v475, -inf
    %479 = vmax.xlane.f32.xlu0 %v478
    %v480 = vpop.xlane.xlu0 %479
    %v481 = vsub.f32 %v475, %v480
    %v482 = vmul.f32 %v481, 1.442695
    %v483 = vpow.pop %v482
    %v484 = vsel %vm401, %v483, 0.0
    %485 = vadd.xlane.f32.xlu0 %v484
    %v486 = vpop.xlane.xlu0 %485
    %v487 = vrcp.pop %v486
    %v488 = vmul.f32 %v483, %v487
    %489 = vst.msk [vmem:[#allocation14] sm:$0xff] %vm401, %v488
    %v491 = vsel %vm401, %v488, 0
    %493 = vmatprep.subr.mxu0 0.0
    %494 = vmatpush1.msra.mxu0 %v393
    %495 = vmatprep.subr.mxu0 0.0
    %496 = vmatpush1.msra.mxu0 0.0
    %497 = vmatprep.subr.mxu0 0.0
    %498 = vmatpush1.msra.mxu0 0.0
    %499 = vmatprep.subr.mxu0 0.0
    %500 = vmatpush1.msra.mxu0 0.0
    %501 = vmatprep.subr.mxu0 0.0
    %502 = vmatpush1.msra.mxu0 0.0
    %503 = vmatprep.subr.mxu0 0.0
    %504 = vmatpush1.msra.mxu0 0.0
    %505 = vmatprep.subr.mxu0 0.0
    %506 = vmatpush1.msra.mxu0 0.0
    %507 = vmatprep.subr.mxu0 0.0
    %508 = vmatpush1.msra.mxu0 0.0
    %509 = vmatprep.subr.mxu0 0.0
    %510 = vmatpush1.msra.mxu0 0.0
    %511 = vmatprep.subr.mxu0 0.0
    %512 = vmatpush1.msra.mxu0 0.0
    %513 = vmatprep.subr.mxu0 0.0
    %514 = vmatpush1.msra.mxu0 0.0
    %515 = vmatprep.subr.mxu0 0.0
    %516 = vmatpush1.msra.mxu0 0.0
    %517 = vmatprep.subr.mxu0 0.0
    %518 = vmatpush1.msra.mxu0 0.0
    %519 = vmatprep.subr.mxu0 0.0
    %520 = vmatpush1.msra.mxu0 0.0
    %521 = vmatprep.subr.mxu0 0.0
    %522 = vmatpush1.msra.mxu0 0.0
    %523 = vmatprep.subr.mxu0 0.0
    %524 = vmatpush1.msra.mxu0 0.0
    %525 = vmatprep.subr.mxu0 0.0
    %526 = vmatpush1.msra.mxu0 0.0
    %527 = vmatprep.subr.mxu0 0.0
    %528 = vmatpush1.msra.mxu0 0.0
    %529 = vmatprep.subr.mxu0 0.0
    %530 = vmatpush1.msra.mxu0 0.0
    %531 = vmatprep.subr.mxu0 0.0
    %532 = vmatpush1.msra.mxu0 0.0
    %533 = vmatprep.subr.mxu0 0.0
    %534 = vmatpush1.msra.mxu0 0.0
    %535 = vmatprep.subr.mxu0 0.0
    %536 = vmatpush1.msra.mxu0 0.0
    %537 = vmatprep.subr.mxu0 0.0
    %538 = vmatpush1.msra.mxu0 0.0
    %539 = vmatprep.subr.mxu0 0.0
    %540 = vmatpush1.msra.mxu0 0.0
    %541 = vmatprep.subr.mxu0 0.0
    %542 = vmatpush1.msra.mxu0 0.0
    %543 = vmatprep.subr.mxu0 0.0
    %544 = vmatpush1.msra.mxu0 0.0
    %545 = vmatprep.subr.mxu0 0.0
    %546 = vmatpush1.msra.mxu0 0.0
    %547 = vmatprep.subr.mxu0 0.0
    %548 = vmatpush1.msra.mxu0 0.0
    %549 = vmatprep.subr.mxu0 0.0
    %550 = vmatpush1.msra.mxu0 0.0
    %551 = vmatprep.subr.mxu0 0.0
    %552 = vmatpush1.msra.mxu0 0.0
    %553 = vmatprep.subr.mxu0 0.0
    %554 = vmatpush1.msra.mxu0 0.0
    %555 = vmatprep.subr.mxu0 0.0
    %556 = vmatpush1.msra.mxu0 0.0
    %557 = vmatprep.mubr.f32.mxu0 0.0
    %558 = vmatmul.mubr.f32.gmra.mrb[0].mxu0 %v491
    %v559 = vpop.f32.mrb[0].mxu0
    %v560 = vadd.f32 0.0, %v559
    %v561 = vpop.f32.mrb[0].mxu0
    %562 = vdwg.mxu0
    %563 = vrot.lane.b32.xlu0 %v217, 120
    %v564 = vpop.permute.xlu0 %563
    %565 = vrot.lane.b32.xlu0 %v305, 120
    %v566 = vpop.permute.xlu0 %565
    %v567 = vsel %vm401, %v564, 0
    %v569 = vsel %vm401, %v566, 0
    %571 = vmatprep.subr.mxu0 0.0
    %572 = vmatpush1.xpose.msra.mxu0 %v569
    %573 = vmatprep.subr.mxu0 0.0
    %574 = vmatpush1.xpose.msra.mxu0 0.0
    %575 = vmatprep.subr.mxu0 0.0
    %576 = vmatpush1.xpose.msra.mxu0 0.0
    %577 = vmatprep.subr.mxu0 0.0
    %578 = vmatpush1.xpose.msra.mxu0 0.0
    %579 = vmatprep.subr.mxu0 0.0
    %580 = vmatpush1.xpose.msra.mxu0 0.0
    %581 = vmatprep.subr.mxu0 0.0
    %582 = vmatpush1.xpose.msra.mxu0 0.0
    %583 = vmatprep.subr.mxu0 0.0
    %584 = vmatpush1.xpose.msra.mxu0 0.0
    %585 = vmatprep.subr.mxu0 0.0
    %586 = vmatpush1.xpose.msra.mxu0 0.0
    %587 = vmatprep.subr.mxu0 0.0
    %588 = vmatpush1.xpose.msra.mxu0 0.0
    %589 = vmatprep.subr.mxu0 0.0
    %590 = vmatpush1.xpose.msra.mxu0 0.0
    %591 = vmatprep.subr.mxu0 0.0
    %592 = vmatpush1.xpose.msra.mxu0 0.0
    %593 = vmatprep.subr.mxu0 0.0
    %594 = vmatpush1.xpose.msra.mxu0 0.0
    %595 = vmatprep.subr.mxu0 0.0
    %596 = vmatpush1.xpose.msra.mxu0 0.0
    %597 = vmatprep.subr.mxu0 0.0
    %598 = vmatpush1.xpose.msra.mxu0 0.0
    %599 = vmatprep.subr.mxu0 0.0
    %600 = vmatpush1.xpose.msra.mxu0 0.0
    %601 = vmatprep.subr.mxu0 0.0
    %602 = vmatpush1.xpose.msra.mxu0 0.0
    %603 = vmatprep.subr.mxu0 0.0
    %604 = vmatpush1.xpose.msra.mxu0 0.0
    %605 = vmatprep.subr.mxu0 0.0
    %606 = vmatpush1.xpose.msra.mxu0 0.0
    %607 = vmatprep.subr.mxu0 0.0
    %608 = vmatpush1.xpose.msra.mxu0 0.0
    %609 = vmatprep.subr.mxu0 0.0
    %610 = vmatpush1.xpose.msra.mxu0 0.0
    %611 = vmatprep.subr.mxu0 0.0
    %612 = vmatpush1.xpose.msra.mxu0 0.0
    %613 = vmatprep.subr.mxu0 0.0
    %614 = vmatpush1.xpose.msra.mxu0 0.0
    %615 = vmatprep.subr.mxu0 0.0
    %616 = vmatpush1.xpose.msra.mxu0 0.0
    %617 = vmatprep.subr.mxu0 0.0
    %618 = vmatpush1.xpose.msra.mxu0 0.0
    %619 = vmatprep.subr.mxu0 0.0
    %620 = vmatpush1.xpose.msra.mxu0 0.0
    %621 = vmatprep.subr.mxu0 0.0
    %622 = vmatpush1.xpose.msra.mxu0 0.0
    %623 = vmatprep.subr.mxu0 0.0
    %624 = vmatpush1.xpose.msra.mxu0 0.0
    %625 = vmatprep.subr.mxu0 0.0
    %626 = vmatpush1.xpose.msra.mxu0 0.0
    %627 = vmatprep.subr.mxu0 0.0
    %628 = vmatpush1.xpose.msra.mxu0 0.0
    %629 = vmatprep.subr.mxu0 0.0
    %630 = vmatpush1.xpose.msra.mxu0 0.0
    %631 = vmatprep.subr.mxu0 0.0
    %632 = vmatpush1.xpose.msra.mxu0 0.0
    %633 = vmatprep.subr.mxu0 0.0
    %634 = vmatpush1.xpose.msra.mxu0 0.0
    %635 = vmatprep.mubr.f32.mxu0 0.0
    %636 = vmatmul.mubr.f32.gmra.mrb[0].mxu0 %v567
    %v637 = vpop.f32.mrb[0].mxu0
    %v638 = vadd.f32 0.0, %v637
    %v639 = vpop.f32.mrb[0].mxu0
    %640 = vdwg.mxu0
    %v641 = vsel %vm401, %v638, -inf
    %642 = vmax.xlane.f32.xlu0 %v641
    %v643 = vpop.xlane.xlu0 %642
    %v644 = vsub.f32 %v638, %v643
    %v645 = vmul.f32 %v644, 1.442695
    %v646 = vpow.pop %v645
    %v647 = vsel %vm401, %v646, 0.0
    %648 = vadd.xlane.f32.xlu0 %v647
    %v649 = vpop.xlane.xlu0 %648
    %v650 = vrcp.pop %v649
    %v651 = vmul.f32 %v646, %v650
    %s652 = scalar_lea.vmem [#allocation14], 16
    %653 = vst.msk [vmem:[%s652] sm:$0xff] %vm401, %v651
    %655 = vrot.lane.b32.xlu0 %v393, 120
    %v656 = vpop.permute.xlu0 %655
    %v659 = vsel %vm401, %v651, 0
    %661 = vmatprep.subr.mxu0 0.0
    %662 = vmatpush1.msra.mxu0 %v656
    %663 = vmatprep.subr.mxu0 0.0
    %664 = vmatpush1.msra.mxu0 0.0
    %665 = vmatprep.subr.mxu0 0.0
    %666 = vmatpush1.msra.mxu0 0.0
    %667 = vmatprep.subr.mxu0 0.0
    %668 = vmatpush1.msra.mxu0 0.0
    %669 = vmatprep.subr.mxu0 0.0
    %670 = vmatpush1.msra.mxu0 0.0
    %671 = vmatprep.subr.mxu0 0.0
    %672 = vmatpush1.msra.mxu0 0.0
    %673 = vmatprep.subr.mxu0 0.0
    %674 = vmatpush1.msra.mxu0 0.0
    %675 = vmatprep.subr.mxu0 0.0
    %676 = vmatpush1.msra.mxu0 0.0
    %677 = vmatprep.subr.mxu0 0.0
    %678 = vmatpush1.msra.mxu0 0.0
    %679 = vmatprep.subr.mxu0 0.0
    %680 = vmatpush1.msra.mxu0 0.0
    %681 = vmatprep.subr.mxu0 0.0
    %682 = vmatpush1.msra.mxu0 0.0
    %683 = vmatprep.subr.mxu0 0.0
    %684 = vmatpush1.msra.mxu0 0.0
    %685 = vmatprep.subr.mxu0 0.0
    %686 = vmatpush1.msra.mxu0 0.0
    %687 = vmatprep.subr.mxu0 0.0
    %688 = vmatpush1.msra.mxu0 0.0
    %689 = vmatprep.subr.mxu0 0.0
    %690 = vmatpush1.msra.mxu0 0.0
    %691 = vmatprep.subr.mxu0 0.0
    %692 = vmatpush1.msra.mxu0 0.0
    %693 = vmatprep.subr.mxu0 0.0
    %694 = vmatpush1.msra.mxu0 0.0
    %695 = vmatprep.subr.mxu0 0.0
    %696 = vmatpush1.msra.mxu0 0.0
    %697 = vmatprep.subr.mxu0 0.0
    %698 = vmatpush1.msra.mxu0 0.0
    %699 = vmatprep.subr.mxu0 0.0
    %700 = vmatpush1.msra.mxu0 0.0
    %701 = vmatprep.subr.mxu0 0.0
    %702 = vmatpush1.msra.mxu0 0.0
    %703 = vmatprep.subr.mxu0 0.0
    %704 = vmatpush1.msra.mxu0 0.0
    %705 = vmatprep.subr.mxu0 0.0
    %706 = vmatpush1.msra.mxu0 0.0
    %707 = vmatprep.subr.mxu0 0.0
    %708 = vmatpush1.msra.mxu0 0.0
    %709 = vmatprep.subr.mxu0 0.0
    %710 = vmatpush1.msra.mxu0 0.0
    %711 = vmatprep.subr.mxu0 0.0
    %712 = vmatpush1.msra.mxu0 0.0
    %713 = vmatprep.subr.mxu0 0.0
    %714 = vmatpush1.msra.mxu0 0.0
    %715 = vmatprep.subr.mxu0 0.0
    %716 = vmatpush1.msra.mxu0 0.0
    %717 = vmatprep.subr.mxu0 0.0
    %718 = vmatpush1.msra.mxu0 0.0
    %719 = vmatprep.subr.mxu0 0.0
    %720 = vmatpush1.msra.mxu0 0.0
    %721 = vmatprep.subr.mxu0 0.0
    %722 = vmatpush1.msra.mxu0 0.0
    %723 = vmatprep.subr.mxu0 0.0
    %724 = vmatpush1.msra.mxu0 0.0
    %725 = vmatprep.mubr.f32.mxu0 0.0
    %726 = vmatmul.mubr.f32.gmra.mrb[0].mxu0 %v659
    %v727 = vpop.f32.mrb[0].mxu0
    %v728 = vadd.f32 0.0, %v727
    %v729 = vpop.f32.mrb[0].mxu0
    %730 = vdwg.mxu0
    %731 = vrot.lane.b32.xlu0 %v217, 112
    %v732 = vpop.permute.xlu0 %731
    %733 = vrot.lane.b32.xlu0 %v305, 112
    %v734 = vpop.permute.xlu0 %733
    %v735 = vsel %vm401, %v732, 0
    %v737 = vsel %vm401, %v734, 0
    %739 = vmatprep.subr.mxu0 0.0
    %740 = vmatpush1.xpose.msra.mxu0 %v737
    %741 = vmatprep.subr.mxu0 0.0
    %742 = vmatpush1.xpose.msra.mxu0 0.0
    %743 = vmatprep.subr.mxu0 0.0
    %744 = vmatpush1.xpose.msra.mxu0 0.0
    %745 = vmatprep.subr.mxu0 0.0
    %746 = vmatpush1.xpose.msra.mxu0 0.0
    %747 = vmatprep.subr.mxu0 0.0
    %748 = vmatpush1.xpose.msra.mxu0 0.0
    %749 = vmatprep.subr.mxu0 0.0
    %750 = vmatpush1.xpose.msra.mxu0 0.0
    %751 = vmatprep.subr.mxu0 0.0
    %752 = vmatpush1.xpose.msra.mxu0 0.0
    %753 = vmatprep.subr.mxu0 0.0
    %754 = vmatpush1.xpose.msra.mxu0 0.0
    %755 = vmatprep.subr.mxu0 0.0
    %756 = vmatpush1.xpose.msra.mxu0 0.0
    %757 = vmatprep.subr.mxu0 0.0
    %758 = vmatpush1.xpose.msra.mxu0 0.0
    %759 = vmatprep.subr.mxu0 0.0
    %760 = vmatpush1.xpose.msra.mxu0 0.0
    %761 = vmatprep.subr.mxu0 0.0
    %762 = vmatpush1.xpose.msra.mxu0 0.0
    %763 = vmatprep.subr.mxu0 0.0
    %764 = vmatpush1.xpose.msra.mxu0 0.0
    %765 = vmatprep.subr.mxu0 0.0
    %766 = vmatpush1.xpose.msra.mxu0 0.0
    %767 = vmatprep.subr.mxu0 0.0
    %768 = vmatpush1.xpose.msra.mxu0 0.0
    %769 = vmatprep.subr.mxu0 0.0
    %770 = vmatpush1.xpose.msra.mxu0 0.0
    %771 = vmatprep.subr.mxu0 0.0
    %772 = vmatpush1.xpose.msra.mxu0 0.0
    %773 = vmatprep.subr.mxu0 0.0
    %774 = vmatpush1.xpose.msra.mxu0 0.0
    %775 = vmatprep.subr.mxu0 0.0
    %776 = vmatpush1.xpose.msra.mxu0 0.0
    %777 = vmatprep.subr.mxu0 0.0
    %778 = vmatpush1.xpose.msra.mxu0 0.0
    %779 = vmatprep.subr.mxu0 0.0
    %780 = vmatpush1.xpose.msra.mxu0 0.0
    %781 = vmatprep.subr.mxu0 0.0
    %782 = vmatpush1.xpose.msra.mxu0 0.0
    %783 = vmatprep.subr.mxu0 0.0
    %784 = vmatpush1.xpose.msra.mxu0 0.0
    %785 = vmatprep.subr.mxu0 0.0
    %786 = vmatpush1.xpose.msra.mxu0 0.0
    %787 = vmatprep.subr.mxu0 0.0
    %788 = vmatpush1.xpose.msra.mxu0 0.0
    %789 = vmatprep.subr.mxu0 0.0
    %790 = vmatpush1.xpose.msra.mxu0 0.0
    %791 = vmatprep.subr.mxu0 0.0
    %792 = vmatpush1.xpose.msra.mxu0 0.0
    %793 = vmatprep.subr.mxu0 0.0
    %794 = vmatpush1.xpose.msra.mxu0 0.0
    %795 = vmatprep.subr.mxu0 0.0
    %796 = vmatpush1.xpose.msra.mxu0 0.0
    %797 = vmatprep.subr.mxu0 0.0
    %798 = vmatpush1.xpose.msra.mxu0 0.0
    %799 = vmatprep.subr.mxu0 0.0
    %800 = vmatpush1.xpose.msra.mxu0 0.0
    %801 = vmatprep.subr.mxu0 0.0
    %802 = vmatpush1.xpose.msra.mxu0 0.0
    %803 = vmatprep.mubr.f32.mxu0 0.0
    %804 = vmatmul.mubr.f32.gmra.mrb[0].mxu0 %v735
    %v805 = vpop.f32.mrb[0].mxu0
    %v806 = vadd.f32 0.0, %v805
    %v807 = vpop.f32.mrb[0].mxu0
    %808 = vdwg.mxu0
    %v809 = vsel %vm401, %v806, -inf
    %810 = vmax.xlane.f32.xlu0 %v809
    %v811 = vpop.xlane.xlu0 %810
    %v812 = vsub.f32 %v806, %v811
    %v813 = vmul.f32 %v812, 1.442695
    %v814 = vpow.pop %v813
    %v815 = vsel %vm401, %v814, 0.0
    %816 = vadd.xlane.f32.xlu0 %v815
    %v817 = vpop.xlane.xlu0 %816
    %v818 = vrcp.pop %v817
    %v819 = vmul.f32 %v814, %v818
    %s820 = scalar_lea.vmem [#allocation14], 32
    %821 = vst.msk [vmem:[%s820] sm:$0xff] %vm401, %v819
    %822 = vrot.lane.b32.xlu0 %v393, 112
    %v823 = vpop.permute.xlu0 %822
    %v826 = vsel %vm401, %v819, 0
    %828 = vmatprep.subr.mxu0 0.0
    %829 = vmatpush1.msra.mxu0 %v823
    %830 = vmatprep.subr.mxu0 0.0
    %831 = vmatpush1.msra.mxu0 0.0
    %832 = vmatprep.subr.mxu0 0.0
    %833 = vmatpush1.msra.mxu0 0.0
    %834 = vmatprep.subr.mxu0 0.0
    %835 = vmatpush1.msra.mxu0 0.0
    %836 = vmatprep.subr.mxu0 0.0
    %837 = vmatpush1.msra.mxu0 0.0
    %838 = vmatprep.subr.mxu0 0.0
    %839 = vmatpush1.msra.mxu0 0.0
    %840 = vmatprep.subr.mxu0 0.0
    %841 = vmatpush1.msra.mxu0 0.0
    %842 = vmatprep.subr.mxu0 0.0
    %843 = vmatpush1.msra.mxu0 0.0
    %844 = vmatprep.subr.mxu0 0.0
    %845 = vmatpush1.msra.mxu0 0.0
    %846 = vmatprep.subr.mxu0 0.0
    %847 = vmatpush1.msra.mxu0 0.0
    %848 = vmatprep.subr.mxu0 0.0
    %849 = vmatpush1.msra.mxu0 0.0
    %850 = vmatprep.subr.mxu0 0.0
    %851 = vmatpush1.msra.mxu0 0.0
    %852 = vmatprep.subr.mxu0 0.0
    %853 = vmatpush1.msra.mxu0 0.0
    %854 = vmatprep.subr.mxu0 0.0
    %855 = vmatpush1.msra.mxu0 0.0
    %856 = vmatprep.subr.mxu0 0.0
    %857 = vmatpush1.msra.mxu0 0.0
    %858 = vmatprep.subr.mxu0 0.0
    %859 = vmatpush1.msra.mxu0 0.0
    %860 = vmatprep.subr.mxu0 0.0
    %861 = vmatpush1.msra.mxu0 0.0
    %862 = vmatprep.subr.mxu0 0.0
    %863 = vmatpush1.msra.mxu0 0.0
    %864 = vmatprep.subr.mxu0 0.0
    %865 = vmatpush1.msra.mxu0 0.0
    %866 = vmatprep.subr.mxu0 0.0
    %867 = vmatpush1.msra.mxu0 0.0
    %868 = vmatprep.subr.mxu0 0.0
    %869 = vmatpush1.msra.mxu0 0.0
    %870 = vmatprep.subr.mxu0 0.0
    %871 = vmatpush1.msra.mxu0 0.0
    %872 = vmatprep.subr.mxu0 0.0
    %873 = vmatpush1.msra.mxu0 0.0
    %874 = vmatprep.subr.mxu0 0.0
    %875 = vmatpush1.msra.mxu0 0.0
    %876 = vmatprep.subr.mxu0 0.0
    %877 = vmatpush1.msra.mxu0 0.0
    %878 = vmatprep.subr.mxu0 0.0
    %879 = vmatpush1.msra.mxu0 0.0
    %880 = vmatprep.subr.mxu0 0.0
    %881 = vmatpush1.msra.mxu0 0.0
    %882 = vmatprep.subr.mxu0 0.0
    %883 = vmatpush1.msra.mxu0 0.0
    %884 = vmatprep.subr.mxu0 0.0
    %885 = vmatpush1.msra.mxu0 0.0
    %886 = vmatprep.subr.mxu0 0.0
    %887 = vmatpush1.msra.mxu0 0.0
    %888 = vmatprep.subr.mxu0 0.0
    %889 = vmatpush1.msra.mxu0 0.0
    %890 = vmatprep.subr.mxu0 0.0
    %891 = vmatpush1.msra.mxu0 0.0
    %892 = vmatprep.mubr.f32.mxu0 0.0
    %893 = vmatmul.mubr.f32.gmra.mrb[0].mxu0 %v826
    %v894 = vpop.f32.mrb[0].mxu0
    %v895 = vadd.f32 0.0, %v894
    %v896 = vpop.f32.mrb[0].mxu0
    %897 = vdwg.mxu0
    %898 = vrot.lane.b32.xlu0 %v217, 104
    %v899 = vpop.permute.xlu0 %898
    %900 = vrot.lane.b32.xlu0 %v305, 104
    %v901 = vpop.permute.xlu0 %900
    %v902 = vsel %vm401, %v899, 0
    %v904 = vsel %vm401, %v901, 0
    %906 = vmatprep.subr.mxu0 0.0
    %907 = vmatpush1.xpose.msra.mxu0 %v904
    %908 = vmatprep.subr.mxu0 0.0
    %909 = vmatpush1.xpose.msra.mxu0 0.0
    %910 = vmatprep.subr.mxu0 0.0
    %911 = vmatpush1.xpose.msra.mxu0 0.0
    %912 = vmatprep.subr.mxu0 0.0
    %913 = vmatpush1.xpose.msra.mxu0 0.0
    %914 = vmatprep.subr.mxu0 0.0
    %915 = vmatpush1.xpose.msra.mxu0 0.0
    %916 = vmatprep.subr.mxu0 0.0
    %917 = vmatpush1.xpose.msra.mxu0 0.0
    %918 = vmatprep.subr.mxu0 0.0
    %919 = vmatpush1.xpose.msra.mxu0 0.0
    %920 = vmatprep.subr.mxu0 0.0
    %921 = vmatpush1.xpose.msra.mxu0 0.0
    %922 = vmatprep.subr.mxu0 0.0
    %923 = vmatpush1.xpose.msra.mxu0 0.0
    %924 = vmatprep.subr.mxu0 0.0
    %925 = vmatpush1.xpose.msra.mxu0 0.0
    %926 = vmatprep.subr.mxu0 0.0
    %927 = vmatpush1.xpose.msra.mxu0 0.0
    %928 = vmatprep.subr.mxu0 0.0
    %929 = vmatpush1.xpose.msra.mxu0 0.0
    %930 = vmatprep.subr.mxu0 0.0
    %931 = vmatpush1.xpose.msra.mxu0 0.0
    %932 = vmatprep.subr.mxu0 0.0
    %933 = vmatpush1.xpose.msra.mxu0 0.0
    %934 = vmatprep.subr.mxu0 0.0
    %935 = vmatpush1.xpose.msra.mxu0 0.0
    %936 = vmatprep.subr.mxu0 0.0
    %937 = vmatpush1.xpose.msra.mxu0 0.0
    %938 = vmatprep.subr.mxu0 0.0
    %939 = vmatpush1.xpose.msra.mxu0 0.0
    %940 = vmatprep.subr.mxu0 0.0
    %941 = vmatpush1.xpose.msra.mxu0 0.0
    %942 = vmatprep.subr.mxu0 0.0
    %943 = vmatpush1.xpose.msra.mxu0 0.0
    %944 = vmatprep.subr.mxu0 0.0
    %945 = vmatpush1.xpose.msra.mxu0 0.0
    %946 = vmatprep.subr.mxu0 0.0
    %947 = vmatpush1.xpose.msra.mxu0 0.0
    %948 = vmatprep.subr.mxu0 0.0
    %949 = vmatpush1.xpose.msra.mxu0 0.0
    %950 = vmatprep.subr.mxu0 0.0
    %951 = vmatpush1.xpose.msra.mxu0 0.0
    %952 = vmatprep.subr.mxu0 0.0
    %953 = vmatpush1.xpose.msra.mxu0 0.0
    %954 = vmatprep.subr.mxu0 0.0
    %955 = vmatpush1.xpose.msra.mxu0 0.0
    %956 = vmatprep.subr.mxu0 0.0
    %957 = vmatpush1.xpose.msra.mxu0 0.0
    %958 = vmatprep.subr.mxu0 0.0
    %959 = vmatpush1.xpose.msra.mxu0 0.0
    %960 = vmatprep.subr.mxu0 0.0
    %961 = vmatpush1.xpose.msra.mxu0 0.0
    %962 = vmatprep.subr.mxu0 0.0
    %963 = vmatpush1.xpose.msra.mxu0 0.0
    %964 = vmatprep.subr.mxu0 0.0
    %965 = vmatpush1.xpose.msra.mxu0 0.0
    %966 = vmatprep.subr.mxu0 0.0
    %967 = vmatpush1.xpose.msra.mxu0 0.0
    %968 = vmatprep.subr.mxu0 0.0
    %969 = vmatpush1.xpose.msra.mxu0 0.0
    %970 = vmatprep.mubr.f32.mxu0 0.0
    %971 = vmatmul.mubr.f32.gmra.mrb[0].mxu0 %v902
    %v972 = vpop.f32.mrb[0].mxu0
    %v973 = vadd.f32 0.0, %v972
    %v974 = vpop.f32.mrb[0].mxu0
    %975 = vdwg.mxu0
    %v976 = vsel %vm401, %v973, -inf
    %977 = vmax.xlane.f32.xlu0 %v976
    %v978 = vpop.xlane.xlu0 %977
    %v979 = vsub.f32 %v973, %v978
    %v980 = vmul.f32 %v979, 1.442695
    %v981 = vpow.pop %v980
    %v982 = vsel %vm401, %v981, 0.0
    %983 = vadd.xlane.f32.xlu0 %v982
    %v984 = vpop.xlane.xlu0 %983
    %v985 = vrcp.pop %v984
    %v986 = vmul.f32 %v981, %v985
    %s987 = scalar_lea.vmem [#allocation14], 48
    %988 = vst.msk [vmem:[%s987] sm:$0xff] %vm401, %v986
    %989 = vrot.lane.b32.xlu0 %v393, 104
    %v990 = vpop.permute.xlu0 %989
    %v993 = vsel %vm401, %v986, 0
    %995 = vmatprep.subr.mxu0 0.0
    %996 = vmatpush1.msra.mxu0 %v990
    %997 = vmatprep.subr.mxu0 0.0
    %998 = vmatpush1.msra.mxu0 0.0
    %999 = vmatprep.subr.mxu0 0.0
    %1000 = vmatpush1.msra.mxu0 0.0
    %1001 = vmatprep.subr.mxu0 0.0
    %1002 = vmatpush1.msra.mxu0 0.0
    %1003 = vmatprep.subr.mxu0 0.0
    %1004 = vmatpush1.msra.mxu0 0.0
    %1005 = vmatprep.subr.mxu0 0.0
    %1006 = vmatpush1.msra.mxu0 0.0
    %1007 = vmatprep.subr.mxu0 0.0
    %1008 = vmatpush1.msra.mxu0 0.0
    %1009 = vmatprep.subr.mxu0 0.0
    %1010 = vmatpush1.msra.mxu0 0.0
    %1011 = vmatprep.subr.mxu0 0.0
    %1012 = vmatpush1.msra.mxu0 0.0
    %1013 = vmatprep.subr.mxu0 0.0
    %1014 = vmatpush1.msra.mxu0 0.0
    %1015 = vmatprep.subr.mxu0 0.0
    %1016 = vmatpush1.msra.mxu0 0.0
    %1017 = vmatprep.subr.mxu0 0.0
    %1018 = vmatpush1.msra.mxu0 0.0
    %1019 = vmatprep.subr.mxu0 0.0
    %1020 = vmatpush1.msra.mxu0 0.0
    %1021 = vmatprep.subr.mxu0 0.0
    %1022 = vmatpush1.msra.mxu0 0.0
    %1023 = vmatprep.subr.mxu0 0.0
    %1024 = vmatpush1.msra.mxu0 0.0
    %1025 = vmatprep.subr.mxu0 0.0
    %1026 = vmatpush1.msra.mxu0 0.0
    %1027 = vmatprep.subr.mxu0 0.0
    %1028 = vmatpush1.msra.mxu0 0.0
    %1029 = vmatprep.subr.mxu0 0.0
    %1030 = vmatpush1.msra.mxu0 0.0
    %1031 = vmatprep.subr.mxu0 0.0
    %1032 = vmatpush1.msra.mxu0 0.0
    %1033 = vmatprep.subr.mxu0 0.0
    %1034 = vmatpush1.msra.mxu0 0.0
    %1035 = vmatprep.subr.mxu0 0.0
    %1036 = vmatpush1.msra.mxu0 0.0
    %1037 = vmatprep.subr.mxu0 0.0
    %1038 = vmatpush1.msra.mxu0 0.0
    %1039 = vmatprep.subr.mxu0 0.0
    %1040 = vmatpush1.msra.mxu0 0.0
    %1041 = vmatprep.subr.mxu0 0.0
    %1042 = vmatpush1.msra.mxu0 0.0
    %1043 = vmatprep.subr.mxu0 0.0
    %1044 = vmatpush1.msra.mxu0 0.0
    %1045 = vmatprep.subr.mxu0 0.0
    %1046 = vmatpush1.msra.mxu0 0.0
    %1047 = vmatprep.subr.mxu0 0.0
    %1048 = vmatpush1.msra.mxu0 0.0
    %1049 = vmatprep.subr.mxu0 0.0
    %1050 = vmatpush1.msra.mxu0 0.0
    %1051 = vmatprep.subr.mxu0 0.0
    %1052 = vmatpush1.msra.mxu0 0.0
    %1053 = vmatprep.subr.mxu0 0.0
    %1054 = vmatpush1.msra.mxu0 0.0
    %1055 = vmatprep.subr.mxu0 0.0
    %1056 = vmatpush1.msra.mxu0 0.0
    %1057 = vmatprep.subr.mxu0 0.0
    %1058 = vmatpush1.msra.mxu0 0.0
    %1059 = vmatprep.mubr.f32.mxu0 0.0
    %1060 = vmatmul.mubr.f32.gmra.mrb[0].mxu0 %v993
    %v1061 = vpop.f32.mrb[0].mxu0
    %v1062 = vadd.f32 0.0, %v1061
    %v1063 = vpop.f32.mrb[0].mxu0
    %1064 = vdwg.mxu0
    %1066 = vrot.lane.b32.xlu0 %v728, 8
    %v1067 = vpop.permute.xlu0 %1066
    %1070 = vrot.lane.b32.xlu0 %v895, 16
    %v1071 = vpop.permute.xlu0 %1070
    %1074 = vrot.lane.b32.xlu0 %v1062, 24
    %v1075 = vpop.permute.xlu0 %1074
    %v1077 = vsel %vm401, %v560, %v1067
    %vm1078 = vcmask 130048
    %v1079 = vsel %vm1078, %v1077, %v1071
    %vm1080 = vcmask 195584
    %v1081 = vsel %vm1080, %v1079, %v1075
    %1082 = vst.msk [vmem:[#allocation13] sm:$0xff] %vm143, %v1081
    %v1084 = vsel %vm401, %v222, 0
    %v1087 = vsel %vm401, %v310, 0
    %1089 = vmatprep.subr.mxu0 0.0
    %1090 = vmatpush1.xpose.msra.mxu0 %v1087
    %1091 = vmatprep.subr.mxu0 0.0
    %1092 = vmatpush1.xpose.msra.mxu0 0.0
    %1093 = vmatprep.subr.mxu0 0.0
    %1094 = vmatpush1.xpose.msra.mxu0 0.0
    %1095 = vmatprep.subr.mxu0 0.0
    %1096 = vmatpush1.xpose.msra.mxu0 0.0
    %1097 = vmatprep.subr.mxu0 0.0
    %1098 = vmatpush1.xpose.msra.mxu0 0.0
    %1099 = vmatprep.subr.mxu0 0.0
    %1100 = vmatpush1.xpose.msra.mxu0 0.0
    %1101 = vmatprep.subr.mxu0 0.0
    %1102 = vmatpush1.xpose.msra.mxu0 0.0
    %1103 = vmatprep.subr.mxu0 0.0
    %1104 = vmatpush1.xpose.msra.mxu0 0.0
    %1105 = vmatprep.subr.mxu0 0.0
    %1106 = vmatpush1.xpose.msra.mxu0 0.0
    %1107 = vmatprep.subr.mxu0 0.0
    %1108 = vmatpush1.xpose.msra.mxu0 0.0
    %1109 = vmatprep.subr.mxu0 0.0
    %1110 = vmatpush1.xpose.msra.mxu0 0.0
    %1111 = vmatprep.subr.mxu0 0.0
    %1112 = vmatpush1.xpose.msra.mxu0 0.0
    %1113 = vmatprep.subr.mxu0 0.0
    %1114 = vmatpush1.xpose.msra.mxu0 0.0
    %1115 = vmatprep.subr.mxu0 0.0
    %1116 = vmatpush1.xpose.msra.mxu0 0.0
    %1117 = vmatprep.subr.mxu0 0.0
    %1118 = vmatpush1.xpose.msra.mxu0 0.0
    %1119 = vmatprep.subr.mxu0 0.0
    %1120 = vmatpush1.xpose.msra.mxu0 0.0
    %1121 = vmatprep.subr.mxu0 0.0
    %1122 = vmatpush1.xpose.msra.mxu0 0.0
    %1123 = vmatprep.subr.mxu0 0.0
    %1124 = vmatpush1.xpose.msra.mxu0 0.0
    %1125 = vmatprep.subr.mxu0 0.0
    %1126 = vmatpush1.xpose.msra.mxu0 0.0
    %1127 = vmatprep.subr.mxu0 0.0
    %1128 = vmatpush1.xpose.msra.mxu0 0.0
    %1129 = vmatprep.subr.mxu0 0.0
    %1130 = vmatpush1.xpose.msra.mxu0 0.0
    %1131 = vmatprep.subr.mxu0 0.0
    %1132 = vmatpush1.xpose.msra.mxu0 0.0
    %1133 = vmatprep.subr.mxu0 0.0
    %1134 = vmatpush1.xpose.msra.mxu0 0.0
    %1135 = vmatprep.subr.mxu0 0.0
    %1136 = vmatpush1.xpose.msra.mxu0 0.0
    %1137 = vmatprep.subr.mxu0 0.0
    %1138 = vmatpush1.xpose.msra.mxu0 0.0
    %1139 = vmatprep.subr.mxu0 0.0
    %1140 = vmatpush1.xpose.msra.mxu0 0.0
    %1141 = vmatprep.subr.mxu0 0.0
    %1142 = vmatpush1.xpose.msra.mxu0 0.0
    %1143 = vmatprep.subr.mxu0 0.0
    %1144 = vmatpush1.xpose.msra.mxu0 0.0
    %1145 = vmatprep.subr.mxu0 0.0
    %1146 = vmatpush1.xpose.msra.mxu0 0.0
    %1147 = vmatprep.subr.mxu0 0.0
    %1148 = vmatpush1.xpose.msra.mxu0 0.0
    %1149 = vmatprep.subr.mxu0 0.0
    %1150 = vmatpush1.xpose.msra.mxu0 0.0
    %1151 = vmatprep.subr.mxu0 0.0
    %1152 = vmatpush1.xpose.msra.mxu0 0.0
    %1153 = vmatprep.mubr.f32.mxu0 0.0
    %1154 = vmatmul.mubr.f32.gmra.mrb[0].mxu0 %v1084
    %v1155 = vpop.f32.mrb[0].mxu0
    %v1156 = vadd.f32 0.0, %v1155
    %v1157 = vpop.f32.mrb[0].mxu0
    %1158 = vdwg.mxu0
    %v1159 = vsel %vm401, %v1156, -inf
    %1160 = vmax.xlane.f32.xlu0 %v1159
    %v1161 = vpop.xlane.xlu0 %1160
    %v1162 = vsub.f32 %v1156, %v1161
    %v1163 = vmul.f32 %v1162, 1.442695
    %v1164 = vpow.pop %v1163
    %v1165 = vsel %vm401, %v1164, 0.0
    %1166 = vadd.xlane.f32.xlu0 %v1165
    %v1167 = vpop.xlane.xlu0 %1166
    %v1168 = vrcp.pop %v1167
    %v1169 = vmul.f32 %v1164, %v1168
    %s1170 = scalar_lea.vmem [#allocation14], 8
    %1171 = vst.msk [vmem:[%s1170] sm:$0xff] %vm401, %v1169
    %v1173 = vsel %vm401, %v1169, 0
    %1175 = vmatprep.subr.mxu0 0.0
    %1176 = vmatpush1.msra.mxu0 %v398
    %1177 = vmatprep.subr.mxu0 0.0
    %1178 = vmatpush1.msra.mxu0 0.0
    %1179 = vmatprep.subr.mxu0 0.0
    %1180 = vmatpush1.msra.mxu0 0.0
    %1181 = vmatprep.subr.mxu0 0.0
    %1182 = vmatpush1.msra.mxu0 0.0
    %1183 = vmatprep.subr.mxu0 0.0
    %1184 = vmatpush1.msra.mxu0 0.0
    %1185 = vmatprep.subr.mxu0 0.0
    %1186 = vmatpush1.msra.mxu0 0.0
    %1187 = vmatprep.subr.mxu0 0.0
    %1188 = vmatpush1.msra.mxu0 0.0
    %1189 = vmatprep.subr.mxu0 0.0
    %1190 = vmatpush1.msra.mxu0 0.0
    %1191 = vmatprep.subr.mxu0 0.0
    %1192 = vmatpush1.msra.mxu0 0.0
    %1193 = vmatprep.subr.mxu0 0.0
    %1194 = vmatpush1.msra.mxu0 0.0
    %1195 = vmatprep.subr.mxu0 0.0
    %1196 = vmatpush1.msra.mxu0 0.0
    %1197 = vmatprep.subr.mxu0 0.0
    %1198 = vmatpush1.msra.mxu0 0.0
    %1199 = vmatprep.subr.mxu0 0.0
    %1200 = vmatpush1.msra.mxu0 0.0
    %1201 = vmatprep.subr.mxu0 0.0
    %1202 = vmatpush1.msra.mxu0 0.0
    %1203 = vmatprep.subr.mxu0 0.0
    %1204 = vmatpush1.msra.mxu0 0.0
    %1205 = vmatprep.subr.mxu0 0.0
    %1206 = vmatpush1.msra.mxu0 0.0
    %1207 = vmatprep.subr.mxu0 0.0
    %1208 = vmatpush1.msra.mxu0 0.0
    %1209 = vmatprep.subr.mxu0 0.0
    %1210 = vmatpush1.msra.mxu0 0.0
    %1211 = vmatprep.subr.mxu0 0.0
    %1212 = vmatpush1.msra.mxu0 0.0
    %1213 = vmatprep.subr.mxu0 0.0
    %1214 = vmatpush1.msra.mxu0 0.0
    %1215 = vmatprep.subr.mxu0 0.0
    %1216 = vmatpush1.msra.mxu0 0.0
    %1217 = vmatprep.subr.mxu0 0.0
    %1218 = vmatpush1.msra.mxu0 0.0
    %1219 = vmatprep.subr.mxu0 0.0
    %1220 = vmatpush1.msra.mxu0 0.0
    %1221 = vmatprep.subr.mxu0 0.0
    %1222 = vmatpush1.msra.mxu0 0.0
    %1223 = vmatprep.subr.mxu0 0.0
    %1224 = vmatpush1.msra.mxu0 0.0
    %1225 = vmatprep.subr.mxu0 0.0
    %1226 = vmatpush1.msra.mxu0 0.0
    %1227 = vmatprep.subr.mxu0 0.0
    %1228 = vmatpush1.msra.mxu0 0.0
    %1229 = vmatprep.subr.mxu0 0.0
    %1230 = vmatpush1.msra.mxu0 0.0
    %1231 = vmatprep.subr.mxu0 0.0
    %1232 = vmatpush1.msra.mxu0 0.0
    %1233 = vmatprep.subr.mxu0 0.0
    %1234 = vmatpush1.msra.mxu0 0.0
    %1235 = vmatprep.subr.mxu0 0.0
    %1236 = vmatpush1.msra.mxu0 0.0
    %1237 = vmatprep.subr.mxu0 0.0
    %1238 = vmatpush1.msra.mxu0 0.0
    %1239 = vmatprep.mubr.f32.mxu0 0.0
    %1240 = vmatmul.mubr.f32.gmra.mrb[0].mxu0 %v1173
    %v1241 = vpop.f32.mrb[0].mxu0
    %v1242 = vadd.f32 0.0, %v1241
    %v1243 = vpop.f32.mrb[0].mxu0
    %1244 = vdwg.mxu0
    %1245 = vrot.lane.b32.xlu0 %v222, 120
    %v1246 = vpop.permute.xlu0 %1245
    %1247 = vrot.lane.b32.xlu0 %v310, 120
    %v1248 = vpop.permute.xlu0 %1247
    %v1249 = vsel %vm401, %v1246, 0
    %v1251 = vsel %vm401, %v1248, 0
    %1253 = vmatprep.subr.mxu0 0.0
    %1254 = vmatpush1.xpose.msra.mxu0 %v1251
    %1255 = vmatprep.subr.mxu0 0.0
    %1256 = vmatpush1.xpose.msra.mxu0 0.0
    %1257 = vmatprep.subr.mxu0 0.0
    %1258 = vmatpush1.xpose.msra.mxu0 0.0
    %1259 = vmatprep.subr.mxu0 0.0
    %1260 = vmatpush1.xpose.msra.mxu0 0.0
    %1261 = vmatprep.subr.mxu0 0.0
    %1262 = vmatpush1.xpose.msra.mxu0 0.0
    %1263 = vmatprep.subr.mxu0 0.0
    %1264 = vmatpush1.xpose.msra.mxu0 0.0
    %1265 = vmatprep.subr.mxu0 0.0
    %1266 = vmatpush1.xpose.msra.mxu0 0.0
    %1267 = vmatprep.subr.mxu0 0.0
    %1268 = vmatpush1.xpose.msra.mxu0 0.0
    %1269 = vmatprep.subr.mxu0 0.0
    %1270 = vmatpush1.xpose.msra.mxu0 0.0
    %1271 = vmatprep.subr.mxu0 0.0
    %1272 = vmatpush1.xpose.msra.mxu0 0.0
    %1273 = vmatprep.subr.mxu0 0.0
    %1274 = vmatpush1.xpose.msra.mxu0 0.0
    %1275 = vmatprep.subr.mxu0 0.0
    %1276 = vmatpush1.xpose.msra.mxu0 0.0
    %1277 = vmatprep.subr.mxu0 0.0
    %1278 = vmatpush1.xpose.msra.mxu0 0.0
    %1279 = vmatprep.subr.mxu0 0.0
    %1280 = vmatpush1.xpose.msra.mxu0 0.0
    %1281 = vmatprep.subr.mxu0 0.0
    %1282 = vmatpush1.xpose.msra.mxu0 0.0
    %1283 = vmatprep.subr.mxu0 0.0
    %1284 = vmatpush1.xpose.msra.mxu0 0.0
    %1285 = vmatprep.subr.mxu0 0.0
    %1286 = vmatpush1.xpose.msra.mxu0 0.0
    %1287 = vmatprep.subr.mxu0 0.0
    %1288 = vmatpush1.xpose.msra.mxu0 0.0
    %1289 = vmatprep.subr.mxu0 0.0
    %1290 = vmatpush1.xpose.msra.mxu0 0.0
    %1291 = vmatprep.subr.mxu0 0.0
    %1292 = vmatpush1.xpose.msra.mxu0 0.0
    %1293 = vmatprep.subr.mxu0 0.0
    %1294 = vmatpush1.xpose.msra.mxu0 0.0
    %1295 = vmatprep.subr.mxu0 0.0
    %1296 = vmatpush1.xpose.msra.mxu0 0.0
    %1297 = vmatprep.subr.mxu0 0.0
    %1298 = vmatpush1.xpose.msra.mxu0 0.0
    %1299 = vmatprep.subr.mxu0 0.0
    %1300 = vmatpush1.xpose.msra.mxu0 0.0
    %1301 = vmatprep.subr.mxu0 0.0
    %1302 = vmatpush1.xpose.msra.mxu0 0.0
    %1303 = vmatprep.subr.mxu0 0.0
    %1304 = vmatpush1.xpose.msra.mxu0 0.0
    %1305 = vmatprep.subr.mxu0 0.0
    %1306 = vmatpush1.xpose.msra.mxu0 0.0
    %1307 = vmatprep.subr.mxu0 0.0
    %1308 = vmatpush1.xpose.msra.mxu0 0.0
    %1309 = vmatprep.subr.mxu0 0.0
    %1310 = vmatpush1.xpose.msra.mxu0 0.0
    %1311 = vmatprep.subr.mxu0 0.0
    %1312 = vmatpush1.xpose.msra.mxu0 0.0
    %1313 = vmatprep.subr.mxu0 0.0
    %1314 = vmatpush1.xpose.msra.mxu0 0.0
    %1315 = vmatprep.subr.mxu0 0.0
    %1316 = vmatpush1.xpose.msra.mxu0 0.0
    %1317 = vmatprep.mubr.f32.mxu0 0.0
    %1318 = vmatmul.mubr.f32.gmra.mrb[0].mxu0 %v1249
    %v1319 = vpop.f32.mrb[0].mxu0
    %v1320 = vadd.f32 0.0, %v1319
    %v1321 = vpop.f32.mrb[0].mxu0
    %1322 = vdwg.mxu0
    %v1323 = vsel %vm401, %v1320, -inf
    %1324 = vmax.xlane.f32.xlu0 %v1323
    %v1325 = vpop.xlane.xlu0 %1324
    %v1326 = vsub.f32 %v1320, %v1325
    %v1327 = vmul.f32 %v1326, 1.442695
    %v1328 = vpow.pop %v1327
    %v1329 = vsel %vm401, %v1328, 0.0
    %1330 = vadd.xlane.f32.xlu0 %v1329
    %v1331 = vpop.xlane.xlu0 %1330
    %v1332 = vrcp.pop %v1331
    %v1333 = vmul.f32 %v1328, %v1332
    %s1334 = scalar_lea.vmem [#allocation14], 24
    %1335 = vst.msk [vmem:[%s1334] sm:$0xff] %vm401, %v1333
    %1337 = vrot.lane.b32.xlu0 %v398, 120
    %v1338 = vpop.permute.xlu0 %1337
    %v1341 = vsel %vm401, %v1333, 0
    %1343 = vmatprep.subr.mxu0 0.0
    %1344 = vmatpush1.msra.mxu0 %v1338
    %1345 = vmatprep.subr.mxu0 0.0
    %1346 = vmatpush1.msra.mxu0 0.0
    %1347 = vmatprep.subr.mxu0 0.0
    %1348 = vmatpush1.msra.mxu0 0.0
    %1349 = vmatprep.subr.mxu0 0.0
    %1350 = vmatpush1.msra.mxu0 0.0
    %1351 = vmatprep.subr.mxu0 0.0
    %1352 = vmatpush1.msra.mxu0 0.0
    %1353 = vmatprep.subr.mxu0 0.0
    %1354 = vmatpush1.msra.mxu0 0.0
    %1355 = vmatprep.subr.mxu0 0.0
    %1356 = vmatpush1.msra.mxu0 0.0
    %1357 = vmatprep.subr.mxu0 0.0
    %1358 = vmatpush1.msra.mxu0 0.0
    %1359 = vmatprep.subr.mxu0 0.0
    %1360 = vmatpush1.msra.mxu0 0.0
    %1361 = vmatprep.subr.mxu0 0.0
    %1362 = vmatpush1.msra.mxu0 0.0
    %1363 = vmatprep.subr.mxu0 0.0
    %1364 = vmatpush1.msra.mxu0 0.0
    %1365 = vmatprep.subr.mxu0 0.0
    %1366 = vmatpush1.msra.mxu0 0.0
    %1367 = vmatprep.subr.mxu0 0.0
    %1368 = vmatpush1.msra.mxu0 0.0
    %1369 = vmatprep.subr.mxu0 0.0
    %1370 = vmatpush1.msra.mxu0 0.0
    %1371 = vmatprep.subr.mxu0 0.0
    %1372 = vmatpush1.msra.mxu0 0.0
    %1373 = vmatprep.subr.mxu0 0.0
    %1374 = vmatpush1.msra.mxu0 0.0
    %1375 = vmatprep.subr.mxu0 0.0
    %1376 = vmatpush1.msra.mxu0 0.0
    %1377 = vmatprep.subr.mxu0 0.0
    %1378 = vmatpush1.msra.mxu0 0.0
    %1379 = vmatprep.subr.mxu0 0.0
    %1380 = vmatpush1.msra.mxu0 0.0
    %1381 = vmatprep.subr.mxu0 0.0
    %1382 = vmatpush1.msra.mxu0 0.0
    %1383 = vmatprep.subr.mxu0 0.0
    %1384 = vmatpush1.msra.mxu0 0.0
    %1385 = vmatprep.subr.mxu0 0.0
    %1386 = vmatpush1.msra.mxu0 0.0
    %1387 = vmatprep.subr.mxu0 0.0
    %1388 = vmatpush1.msra.mxu0 0.0
    %1389 = vmatprep.subr.mxu0 0.0
    %1390 = vmatpush1.msra.mxu0 0.0
    %1391 = vmatprep.subr.mxu0 0.0
    %1392 = vmatpush1.msra.mxu0 0.0
    %1393 = vmatprep.subr.mxu0 0.0
    %1394 = vmatpush1.msra.mxu0 0.0
    %1395 = vmatprep.subr.mxu0 0.0
    %1396 = vmatpush1.msra.mxu0 0.0
    %1397 = vmatprep.subr.mxu0 0.0
    %1398 = vmatpush1.msra.mxu0 0.0
    %1399 = vmatprep.subr.mxu0 0.0
    %1400 = vmatpush1.msra.mxu0 0.0
    %1401 = vmatprep.subr.mxu0 0.0
    %1402 = vmatpush1.msra.mxu0 0.0
    %1403 = vmatprep.subr.mxu0 0.0
    %1404 = vmatpush1.msra.mxu0 0.0
    %1405 = vmatprep.subr.mxu0 0.0
    %1406 = vmatpush1.msra.mxu0 0.0
    %1407 = vmatprep.mubr.f32.mxu0 0.0
    %1408 = vmatmul.mubr.f32.gmra.mrb[0].mxu0 %v1341
    %v1409 = vpop.f32.mrb[0].mxu0
    %v1410 = vadd.f32 0.0, %v1409
    %v1411 = vpop.f32.mrb[0].mxu0
    %1412 = vdwg.mxu0
    %1413 = vrot.lane.b32.xlu0 %v222, 112
    %v1414 = vpop.permute.xlu0 %1413
    %1415 = vrot.lane.b32.xlu0 %v310, 112
    %v1416 = vpop.permute.xlu0 %1415
    %v1417 = vsel %vm401, %v1414, 0
    %v1419 = vsel %vm401, %v1416, 0
    %1421 = vmatprep.subr.mxu0 0.0
    %1422 = vmatpush1.xpose.msra.mxu0 %v1419
    %1423 = vmatprep.subr.mxu0 0.0
    %1424 = vmatpush1.xpose.msra.mxu0 0.0
    %1425 = vmatprep.subr.mxu0 0.0
    %1426 = vmatpush1.xpose.msra.mxu0 0.0
    %1427 = vmatprep.subr.mxu0 0.0
    %1428 = vmatpush1.xpose.msra.mxu0 0.0
    %1429 = vmatprep.subr.mxu0 0.0
    %1430 = vmatpush1.xpose.msra.mxu0 0.0
    %1431 = vmatprep.subr.mxu0 0.0
    %1432 = vmatpush1.xpose.msra.mxu0 0.0
    %1433 = vmatprep.subr.mxu0 0.0
    %1434 = vmatpush1.xpose.msra.mxu0 0.0
    %1435 = vmatprep.subr.mxu0 0.0
    %1436 = vmatpush1.xpose.msra.mxu0 0.0
    %1437 = vmatprep.subr.mxu0 0.0
    %1438 = vmatpush1.xpose.msra.mxu0 0.0
    %1439 = vmatprep.subr.mxu0 0.0
    %1440 = vmatpush1.xpose.msra.mxu0 0.0
    %1441 = vmatprep.subr.mxu0 0.0
    %1442 = vmatpush1.xpose.msra.mxu0 0.0
    %1443 = vmatprep.subr.mxu0 0.0
    %1444 = vmatpush1.xpose.msra.mxu0 0.0
    %1445 = vmatprep.subr.mxu0 0.0
    %1446 = vmatpush1.xpose.msra.mxu0 0.0
    %1447 = vmatprep.subr.mxu0 0.0
    %1448 = vmatpush1.xpose.msra.mxu0 0.0
    %1449 = vmatprep.subr.mxu0 0.0
    %1450 = vmatpush1.xpose.msra.mxu0 0.0
    %1451 = vmatprep.subr.mxu0 0.0
    %1452 = vmatpush1.xpose.msra.mxu0 0.0
    %1453 = vmatprep.subr.mxu0 0.0
    %1454 = vmatpush1.xpose.msra.mxu0 0.0
    %1455 = vmatprep.subr.mxu0 0.0
    %1456 = vmatpush1.xpose.msra.mxu0 0.0
    %1457 = vmatprep.subr.mxu0 0.0
    %1458 = vmatpush1.xpose.msra.mxu0 0.0
    %1459 = vmatprep.subr.mxu0 0.0
    %1460 = vmatpush1.xpose.msra.mxu0 0.0
    %1461 = vmatprep.subr.mxu0 0.0
    %1462 = vmatpush1.xpose.msra.mxu0 0.0
    %1463 = vmatprep.subr.mxu0 0.0
    %1464 = vmatpush1.xpose.msra.mxu0 0.0
    %1465 = vmatprep.subr.mxu0 0.0
    %1466 = vmatpush1.xpose.msra.mxu0 0.0
    %1467 = vmatprep.subr.mxu0 0.0
    %1468 = vmatpush1.xpose.msra.mxu0 0.0
    %1469 = vmatprep.subr.mxu0 0.0
    %1470 = vmatpush1.xpose.msra.mxu0 0.0
    %1471 = vmatprep.subr.mxu0 0.0
    %1472 = vmatpush1.xpose.msra.mxu0 0.0
    %1473 = vmatprep.subr.mxu0 0.0
    %1474 = vmatpush1.xpose.msra.mxu0 0.0
    %1475 = vmatprep.subr.mxu0 0.0
    %1476 = vmatpush1.xpose.msra.mxu0 0.0
    %1477 = vmatprep.subr.mxu0 0.0
    %1478 = vmatpush1.xpose.msra.mxu0 0.0
    %1479 = vmatprep.subr.mxu0 0.0
    %1480 = vmatpush1.xpose.msra.mxu0 0.0
    %1481 = vmatprep.subr.mxu0 0.0
    %1482 = vmatpush1.xpose.msra.mxu0 0.0
    %1483 = vmatprep.subr.mxu0 0.0
    %1484 = vmatpush1.xpose.msra.mxu0 0.0
    %1485 = vmatprep.mubr.f32.mxu0 0.0
    %1486 = vmatmul.mubr.f32.gmra.mrb[0].mxu0 %v1417
    %v1487 = vpop.f32.mrb[0].mxu0
    %v1488 = vadd.f32 0.0, %v1487
    %v1489 = vpop.f32.mrb[0].mxu0
    %1490 = vdwg.mxu0
    %v1491 = vsel %vm401, %v1488, -inf
    %1492 = vmax.xlane.f32.xlu0 %v1491
    %v1493 = vpop.xlane.xlu0 %1492
    %v1494 = vsub.f32 %v1488, %v1493
    %v1495 = vmul.f32 %v1494, 1.442695
    %v1496 = vpow.pop %v1495
    %v1497 = vsel %vm401, %v1496, 0.0
    %1498 = vadd.xlane.f32.xlu0 %v1497
    %v1499 = vpop.xlane.xlu0 %1498
    %v1500 = vrcp.pop %v1499
    %v1501 = vmul.f32 %v1496, %v1500
    %s1502 = scalar_lea.vmem [#allocation14], 40
    %1503 = vst.msk [vmem:[%s1502] sm:$0xff] %vm401, %v1501
    %1504 = vrot.lane.b32.xlu0 %v398, 112
    %v1505 = vpop.permute.xlu0 %1504
    %v1508 = vsel %vm401, %v1501, 0
    %1510 = vmatprep.subr.mxu0 0.0
    %1511 = vmatpush1.msra.mxu0 %v1505
    %1512 = vmatprep.subr.mxu0 0.0
    %1513 = vmatpush1.msra.mxu0 0.0
    %1514 = vmatprep.subr.mxu0 0.0
    %1515 = vmatpush1.msra.mxu0 0.0
    %1516 = vmatprep.subr.mxu0 0.0
    %1517 = vmatpush1.msra.mxu0 0.0
    %1518 = vmatprep.subr.mxu0 0.0
    %1519 = vmatpush1.msra.mxu0 0.0
    %1520 = vmatprep.subr.mxu0 0.0
    %1521 = vmatpush1.msra.mxu0 0.0
    %1522 = vmatprep.subr.mxu0 0.0
    %1523 = vmatpush1.msra.mxu0 0.0
    %1524 = vmatprep.subr.mxu0 0.0
    %1525 = vmatpush1.msra.mxu0 0.0
    %1526 = vmatprep.subr.mxu0 0.0
    %1527 = vmatpush1.msra.mxu0 0.0
    %1528 = vmatprep.subr.mxu0 0.0
    %1529 = vmatpush1.msra.mxu0 0.0
    %1530 = vmatprep.subr.mxu0 0.0
    %1531 = vmatpush1.msra.mxu0 0.0
    %1532 = vmatprep.subr.mxu0 0.0
    %1533 = vmatpush1.msra.mxu0 0.0
    %1534 = vmatprep.subr.mxu0 0.0
    %1535 = vmatpush1.msra.mxu0 0.0
    %1536 = vmatprep.subr.mxu0 0.0
    %1537 = vmatpush1.msra.mxu0 0.0
    %1538 = vmatprep.subr.mxu0 0.0
    %1539 = vmatpush1.msra.mxu0 0.0
    %1540 = vmatprep.subr.mxu0 0.0
    %1541 = vmatpush1.msra.mxu0 0.0
    %1542 = vmatprep.subr.mxu0 0.0
    %1543 = vmatpush1.msra.mxu0 0.0
    %1544 = vmatprep.subr.mxu0 0.0
    %1545 = vmatpush1.msra.mxu0 0.0
    %1546 = vmatprep.subr.mxu0 0.0
    %1547 = vmatpush1.msra.mxu0 0.0
    %1548 = vmatprep.subr.mxu0 0.0
    %1549 = vmatpush1.msra.mxu0 0.0
    %1550 = vmatprep.subr.mxu0 0.0
    %1551 = vmatpush1.msra.mxu0 0.0
    %1552 = vmatprep.subr.mxu0 0.0
    %1553 = vmatpush1.msra.mxu0 0.0
    %1554 = vmatprep.subr.mxu0 0.0
    %1555 = vmatpush1.msra.mxu0 0.0
    %1556 = vmatprep.subr.mxu0 0.0
    %1557 = vmatpush1.msra.mxu0 0.0
    %1558 = vmatprep.subr.mxu0 0.0
    %1559 = vmatpush1.msra.mxu0 0.0
    %1560 = vmatprep.subr.mxu0 0.0
    %1561 = vmatpush1.msra.mxu0 0.0
    %1562 = vmatprep.subr.mxu0 0.0
    %1563 = vmatpush1.msra.mxu0 0.0
    %1564 = vmatprep.subr.mxu0 0.0
    %1565 = vmatpush1.msra.mxu0 0.0
    %1566 = vmatprep.subr.mxu0 0.0
    %1567 = vmatpush1.msra.mxu0 0.0
    %1568 = vmatprep.subr.mxu0 0.0
    %1569 = vmatpush1.msra.mxu0 0.0
    %1570 = vmatprep.subr.mxu0 0.0
    %1571 = vmatpush1.msra.mxu0 0.0
    %1572 = vmatprep.subr.mxu0 0.0
    %1573 = vmatpush1.msra.mxu0 0.0
    %1574 = vmatprep.mubr.f32.mxu0 0.0
    %1575 = vmatmul.mubr.f32.gmra.mrb[0].mxu0 %v1508
    %v1576 = vpop.f32.mrb[0].mxu0
    %v1577 = vadd.f32 0.0, %v1576
    %v1578 = vpop.f32.mrb[0].mxu0
    %1579 = vdwg.mxu0
    %1580 = vrot.lane.b32.xlu0 %v222, 104
    %v1581 = vpop.permute.xlu0 %1580
    %1582 = vrot.lane.b32.xlu0 %v310, 104
    %v1583 = vpop.permute.xlu0 %1582
    %v1584 = vsel %vm401, %v1581, 0
    %v1586 = vsel %vm401, %v1583, 0
    %1588 = vmatprep.subr.mxu0 0.0
    %1589 = vmatpush1.xpose.msra.mxu0 %v1586
    %1590 = vmatprep.subr.mxu0 0.0
    %1591 = vmatpush1.xpose.msra.mxu0 0.0
    %1592 = vmatprep.subr.mxu0 0.0
    %1593 = vmatpush1.xpose.msra.mxu0 0.0
    %1594 = vmatprep.subr.mxu0 0.0
    %1595 = vmatpush1.xpose.msra.mxu0 0.0
    %1596 = vmatprep.subr.mxu0 0.0
    %1597 = vmatpush1.xpose.msra.mxu0 0.0
    %1598 = vmatprep.subr.mxu0 0.0
    %1599 = vmatpush1.xpose.msra.mxu0 0.0
    %1600 = vmatprep.subr.mxu0 0.0
    %1601 = vmatpush1.xpose.msra.mxu0 0.0
    %1602 = vmatprep.subr.mxu0 0.0
    %1603 = vmatpush1.xpose.msra.mxu0 0.0
    %1604 = vmatprep.subr.mxu0 0.0
    %1605 = vmatpush1.xpose.msra.mxu0 0.0
    %1606 = vmatprep.subr.mxu0 0.0
    %1607 = vmatpush1.xpose.msra.mxu0 0.0
    %1608 = vmatprep.subr.mxu0 0.0
    %1609 = vmatpush1.xpose.msra.mxu0 0.0
    %1610 = vmatprep.subr.mxu0 0.0
    %1611 = vmatpush1.xpose.msra.mxu0 0.0
    %1612 = vmatprep.subr.mxu0 0.0
    %1613 = vmatpush1.xpose.msra.mxu0 0.0
    %1614 = vmatprep.subr.mxu0 0.0
    %1615 = vmatpush1.xpose.msra.mxu0 0.0
    %1616 = vmatprep.subr.mxu0 0.0
    %1617 = vmatpush1.xpose.msra.mxu0 0.0
    %1618 = vmatprep.subr.mxu0 0.0
    %1619 = vmatpush1.xpose.msra.mxu0 0.0
    %1620 = vmatprep.subr.mxu0 0.0
    %1621 = vmatpush1.xpose.msra.mxu0 0.0
    %1622 = vmatprep.subr.mxu0 0.0
    %1623 = vmatpush1.xpose.msra.mxu0 0.0
    %1624 = vmatprep.subr.mxu0 0.0
    %1625 = vmatpush1.xpose.msra.mxu0 0.0
    %1626 = vmatprep.subr.mxu0 0.0
    %1627 = vmatpush1.xpose.msra.mxu0 0.0
    %1628 = vmatprep.subr.mxu0 0.0
    %1629 = vmatpush1.xpose.msra.mxu0 0.0
    %1630 = vmatprep.subr.mxu0 0.0
    %1631 = vmatpush1.xpose.msra.mxu0 0.0
    %1632 = vmatprep.subr.mxu0 0.0
    %1633 = vmatpush1.xpose.msra.mxu0 0.0
    %1634 = vmatprep.subr.mxu0 0.0
    %1635 = vmatpush1.xpose.msra.mxu0 0.0
    %1636 = vmatprep.subr.mxu0 0.0
    %1637 = vmatpush1.xpose.msra.mxu0 0.0
    %1638 = vmatprep.subr.mxu0 0.0
    %1639 = vmatpush1.xpose.msra.mxu0 0.0
    %1640 = vmatprep.subr.mxu0 0.0
    %1641 = vmatpush1.xpose.msra.mxu0 0.0
    %1642 = vmatprep.subr.mxu0 0.0
    %1643 = vmatpush1.xpose.msra.mxu0 0.0
    %1644 = vmatprep.subr.mxu0 0.0
    %1645 = vmatpush1.xpose.msra.mxu0 0.0
    %1646 = vmatprep.subr.mxu0 0.0
    %1647 = vmatpush1.xpose.msra.mxu0 0.0
    %1648 = vmatprep.subr.mxu0 0.0
    %1649 = vmatpush1.xpose.msra.mxu0 0.0
    %1650 = vmatprep.subr.mxu0 0.0
    %1651 = vmatpush1.xpose.msra.mxu0 0.0
    %1652 = vmatprep.mubr.f32.mxu0 0.0
    %1653 = vmatmul.mubr.f32.gmra.mrb[0].mxu0 %v1584
    %v1654 = vpop.f32.mrb[0].mxu0
    %v1655 = vadd.f32 0.0, %v1654
    %v1656 = vpop.f32.mrb[0].mxu0
    %1657 = vdwg.mxu0
    %v1658 = vsel %vm401, %v1655, -inf
    %1659 = vmax.xlane.f32.xlu0 %v1658
    %v1660 = vpop.xlane.xlu0 %1659
    %v1661 = vsub.f32 %v1655, %v1660
    %v1662 = vmul.f32 %v1661, 1.442695
    %v1663 = vpow.pop %v1662
    %v1664 = vsel %vm401, %v1663, 0.0
    %1665 = vadd.xlane.f32.xlu0 %v1664
    %v1666 = vpop.xlane.xlu0 %1665
    %v1667 = vrcp.pop %v1666
    %v1668 = vmul.f32 %v1663, %v1667
    %s1669 = scalar_lea.vmem [#allocation14], 56
    %1670 = vst.msk [vmem:[%s1669] sm:$0xff] %vm401, %v1668
    %1671 = vrot.lane.b32.xlu0 %v398, 104
    %v1672 = vpop.permute.xlu0 %1671
    %v1675 = vsel %vm401, %v1668, 0
    %1677 = vmatprep.subr.mxu0 0.0
    %1678 = vmatpush1.msra.mxu0 %v1672
    %1679 = vmatprep.subr.mxu0 0.0
    %1680 = vmatpush1.msra.mxu0 0.0
    %1681 = vmatprep.subr.mxu0 0.0
    %1682 = vmatpush1.msra.mxu0 0.0
    %1683 = vmatprep.subr.mxu0 0.0
    %1684 = vmatpush1.msra.mxu0 0.0
    %1685 = vmatprep.subr.mxu0 0.0
    %1686 = vmatpush1.msra.mxu0 0.0
    %1687 = vmatprep.subr.mxu0 0.0
    %1688 = vmatpush1.msra.mxu0 0.0
    %1689 = vmatprep.subr.mxu0 0.0
    %1690 = vmatpush1.msra.mxu0 0.0
    %1691 = vmatprep.subr.mxu0 0.0
    %1692 = vmatpush1.msra.mxu0 0.0
    %1693 = vmatprep.subr.mxu0 0.0
    %1694 = vmatpush1.msra.mxu0 0.0
    %1695 = vmatprep.subr.mxu0 0.0
    %1696 = vmatpush1.msra.mxu0 0.0
    %1697 = vmatprep.subr.mxu0 0.0
    %1698 = vmatpush1.msra.mxu0 0.0
    %1699 = vmatprep.subr.mxu0 0.0
    %1700 = vmatpush1.msra.mxu0 0.0
    %1701 = vmatprep.subr.mxu0 0.0
    %1702 = vmatpush1.msra.mxu0 0.0
    %1703 = vmatprep.subr.mxu0 0.0
    %1704 = vmatpush1.msra.mxu0 0.0
    %1705 = vmatprep.subr.mxu0 0.0
    %1706 = vmatpush1.msra.mxu0 0.0
    %1707 = vmatprep.subr.mxu0 0.0
    %1708 = vmatpush1.msra.mxu0 0.0
    %1709 = vmatprep.subr.mxu0 0.0
    %1710 = vmatpush1.msra.mxu0 0.0
    %1711 = vmatprep.subr.mxu0 0.0
    %1712 = vmatpush1.msra.mxu0 0.0
    %1713 = vmatprep.subr.mxu0 0.0
    %1714 = vmatpush1.msra.mxu0 0.0
    %1715 = vmatprep.subr.mxu0 0.0
    %1716 = vmatpush1.msra.mxu0 0.0
    %1717 = vmatprep.subr.mxu0 0.0
    %1718 = vmatpush1.msra.mxu0 0.0
    %1719 = vmatprep.subr.mxu0 0.0
    %1720 = vmatpush1.msra.mxu0 0.0
    %1721 = vmatprep.subr.mxu0 0.0
    %1722 = vmatpush1.msra.mxu0 0.0
    %1723 = vmatprep.subr.mxu0 0.0
    %1724 = vmatpush1.msra.mxu0 0.0
    %1725 = vmatprep.subr.mxu0 0.0
    %1726 = vmatpush1.msra.mxu0 0.0
    %1727 = vmatprep.subr.mxu0 0.0
    %1728 = vmatpush1.msra.mxu0 0.0
    %1729 = vmatprep.subr.mxu0 0.0
    %1730 = vmatpush1.msra.mxu0 0.0
    %1731 = vmatprep.subr.mxu0 0.0
    %1732 = vmatpush1.msra.mxu0 0.0
    %1733 = vmatprep.subr.mxu0 0.0
    %1734 = vmatpush1.msra.mxu0 0.0
    %1735 = vmatprep.subr.mxu0 0.0
    %1736 = vmatpush1.msra.mxu0 0.0
    %1737 = vmatprep.subr.mxu0 0.0
    %1738 = vmatpush1.msra.mxu0 0.0
    %1739 = vmatprep.subr.mxu0 0.0
    %1740 = vmatpush1.msra.mxu0 0.0
    %1741 = vmatprep.mubr.f32.mxu0 0.0
    %1742 = vmatmul.mubr.f32.gmra.mrb[0].mxu0 %v1675
    %v1743 = vpop.f32.mrb[0].mxu0
    %v1744 = vadd.f32 0.0, %v1743
    %v1745 = vpop.f32.mrb[0].mxu0
    %1746 = vdwg.mxu0
    %1748 = vrot.lane.b32.xlu0 %v1410, 8
    %v1749 = vpop.permute.xlu0 %1748
    %1752 = vrot.lane.b32.xlu0 %v1577, 16
    %v1753 = vpop.permute.xlu0 %1752
    %1756 = vrot.lane.b32.xlu0 %v1744, 24
    %v1757 = vpop.permute.xlu0 %1756
    %v1759 = vsel %vm401, %v1242, %v1749
    %v1760 = vsel %vm1078, %v1759, %v1753
    %v1761 = vsel %vm1080, %v1760, %v1757
    %s1762 = scalar_lea.vmem [#allocation13], 8
    %1763 = vst.msk [vmem:[%s1762] sm:$0xff] %vm143, %v1761
    // Predicated region
    $region62: #{tpu_custom_call.1} parent=1 // pred_check
      _
    $region63: #{tpu_custom_call.1} parent=1 // pred_check_branch
      %1765 = sbr.rel (0) target = $region65
    $region64: #{tpu_custom_call.1} parent=1 // pred_region
      %s1767 = ssub.s32 256, 256
      %1768 = vsyncadd [#allocation4], %s1767
      %s1769 = sshll.u32 [#allocation13], 4
      %s1770 = int_to_ptr.vmem [resolvable:$true] %s1769
      %1775 = dma.vmem_to_hbm [thread:$0]  %s1770, 256, %s9, [#allocation4], 128, 128, 8
    $region65: #{tpu_custom_call.1} parent=1 // pred_fallthru
      _
    // Predicated region
    $region66: #{tpu_custom_call.1} parent=1 // pred_check
      _
    $region67: #{tpu_custom_call.1} parent=1 // pred_check_branch
      %1777 = sbr.rel (0) target = $region69
    $region68: #{tpu_custom_call.1} parent=1 // pred_region
      %s1779 = ssub.s32 1024, 1024
      %1780 = vsyncadd [#allocation15], %s1779
      %s1781 = sshll.u32 [#allocation14], 4
      %s1782 = int_to_ptr.vmem [resolvable:$true] %s1781
      %1787 = dma.vmem_to_hbm [thread:$0]  %s1782, 1024, %s10, [#allocation15], 128, 128, 8
    $region69: #{tpu_custom_call.1} parent=1 // pred_fallthru
      _
    // Predicated region
    $region70: #{tpu_custom_call.1} parent=1 // pred_check
      _
    $region71: #{tpu_custom_call.1} parent=1 // pred_check_branch
      %1789 = sbr.rel (0) target = $region73
    $region72: #{tpu_custom_call.1} parent=1 // pred_region
      %1790 = dma.done [#allocation4], 256
    $region73: #{tpu_custom_call.1} parent=1 // pred_fallthru
      _
    // Predicated region
    $region74: #{tpu_custom_call.1} parent=1 // pred_check
      _
    $region75: #{tpu_custom_call.1} parent=1 // pred_check_branch
      %1792 = sbr.rel (0) target = $region77
    $region76: #{tpu_custom_call.1} parent=1 // pred_region
      %1793 = dma.done [#allocation15], 1024
    $region77: #{tpu_custom_call.1} parent=1 // pred_fallthru
      _
    %1794 = vsyncpa [#allocation3], 1
    %1795 = vsyncpa [#allocation6], 1
    %1796 = vsyncpa [#allocation9], 1
    %1797 = vsyncpa [#allocation12], 1
    %1798 = vsyncpa [#allocation4], 1
    %1799 = vsyncpa [#allocation15], 1

</llo_original>
